<compile_context>
chip_gen: v6e
topology: v6e:2x2x1
jax: 0.10.0
libtpu: 0.0.40
codegen_flags: <defaults>
</compile_context>

<pallas_src>
import functools
import math

import jax
import jax.numpy as jnp
from jax import lax
from jax.experimental import pallas as pl
from jax.experimental.pallas import tpu as pltpu


_VMEM_LIMIT_BYTES = 64 * 1024 * 1024  # cap only; compiler uses what tiles need


def _cparams(dim_sem):
    return pltpu.CompilerParams(
        dimension_semantics=dim_sem, vmem_limit_bytes=_VMEM_LIMIT_BYTES
    )


# ------------------------------ tile helpers ---------------------------------
def _pick_tile(dim, preferred, minimum=128):
    """Largest power-of-two tile <= preferred that divides dim; else full dim."""
    t = preferred
    while t >= minimum:
        if dim % t == 0:
            return t
        t //= 2
    return dim  # full extent is always a legal block shape


def _pick_head_group(num_heads, d_head):
    """Smallest head-group size so the BlockSpec lane slice (hg*dh) is either a
    multiple of 128 (lane-aligned) or the full d_model."""
    for hg in range(1, num_heads + 1):
        if num_heads % hg == 0 and (hg * d_head) % 128 == 0:
            return hg
    return num_heads  # hg*dh == D: block equals full array dim, always legal


# ------------------------- fused Q/K/V projection -----------------------------
def _qkv_proj_kernel(xq_ref, xk_ref, xv_ref, w_ref, b_ref,
                     oq_ref, ok_ref, ov_ref, acc_ref):
    kk = pl.program_id(2)

    @pl.when(kk == 0)
    def _():
        acc_ref[...] = jnp.zeros_like(acc_ref)

    # bf16 MXU operands, f32 accumulation.
    xq = xq_ref[...].astype(jnp.bfloat16)
    xk = xk_ref[...].astype(jnp.bfloat16)
    xv = xv_ref[...].astype(jnp.bfloat16)
    acc_ref[0] += jnp.dot(xq, w_ref[0].astype(jnp.bfloat16),
                          preferred_element_type=jnp.float32)
    acc_ref[1] += jnp.dot(xk, w_ref[1].astype(jnp.bfloat16),
                          preferred_element_type=jnp.float32)
    acc_ref[2] += jnp.dot(xv, w_ref[2].astype(jnp.bfloat16),
                          preferred_element_type=jnp.float32)

    @pl.when(kk == pl.num_programs(2) - 1)
    def _():
        oq_ref[...] = (acc_ref[0] + b_ref[0]).astype(oq_ref.dtype)
        ok_ref[...] = (acc_ref[1] + b_ref[1]).astype(ok_ref.dtype)
        ov_ref[...] = (acc_ref[2] + b_ref[2]).astype(ov_ref.dtype)


def qkv_projection(xq, xk, xv, w_qkv, b_qkv, *, tm=512, tn=512, tk=512,
                   out_dtype=jnp.bfloat16):
    """xq/xk/xv: (M, K); w_qkv: (3, K, N); b_qkv: (3, 1, N) -> 3 x (M, N)."""
    M, K = xq.shape
    N = w_qkv.shape[2]
    tm = _pick_tile(M, tm)
    tn = _pick_tile(N, tn)
    tk = _pick_tile(K, tk)
    grid = (M // tm, N // tn, K // tk)

    out_sds = jax.ShapeDtypeStruct((M, N), out_dtype)
    x_spec = pl.BlockSpec((tm, tk), lambda i, j, kk: (i, kk))
    o_spec = pl.BlockSpec((tm, tn), lambda i, j, kk: (i, j))

    return pl.pallas_call(
        _qkv_proj_kernel,
        out_shape=(out_sds, out_sds, out_sds),
        grid_spec=pltpu.PrefetchScalarGridSpec(
            num_scalar_prefetch=0,
            grid=grid,
            in_specs=[
                x_spec, x_spec, x_spec,
                pl.BlockSpec((3, tk, tn), lambda i, j, kk: (0, kk, j)),
                pl.BlockSpec((3, 1, tn), lambda i, j, kk: (0, 0, j)),
            ],
            out_specs=[o_spec, o_spec, o_spec],
            scratch_shapes=[pltpu.VMEM((3, tm, tn), jnp.float32)],
        ),
        compiler_params=_cparams(("parallel", "parallel", "arbitrary")),
    )(xq, xk, xv, w_qkv, b_qkv)


# ------------------------------ output linear ---------------------------------
def _linear_kernel(x_ref, w_ref, b_ref, o_ref, acc_ref):
    kk = pl.program_id(2)

    @pl.when(kk == 0)
    def _():
        acc_ref[...] = jnp.zeros_like(acc_ref)

    acc_ref[...] += jnp.dot(x_ref[...].astype(jnp.bfloat16),
                            w_ref[...].astype(jnp.bfloat16),
                            preferred_element_type=jnp.float32)

    @pl.when(kk == pl.num_programs(2) - 1)
    def _():
        o_ref[...] = (acc_ref[...] + b_ref[...]).astype(o_ref.dtype)


def linear(x, w, b, *, tm=512, tn=512, tk=512, out_dtype=jnp.float32):
    """x: (M, K), w: (K, N), b: (N,) -> (M, N) = x @ w + b, tiled and pipelined."""
    M, K = x.shape
    N = w.shape[1]
    tm = _pick_tile(M, tm)
    tn = _pick_tile(N, tn)
    tk = _pick_tile(K, tk)
    grid = (M // tm, N // tn, K // tk)

    return pl.pallas_call(
        _linear_kernel,
        out_shape=jax.ShapeDtypeStruct((M, N), out_dtype),
        grid_spec=pltpu.PrefetchScalarGridSpec(
            num_scalar_prefetch=0,
            grid=grid,
            in_specs=[
                pl.BlockSpec((tm, tk), lambda i, j, kk: (i, kk)),
                pl.BlockSpec((tk, tn), lambda i, j, kk: (kk, j)),
                pl.BlockSpec((1, tn), lambda i, j, kk: (0, j)),
            ],
            out_specs=pl.BlockSpec((tm, tn), lambda i, j, kk: (i, j)),
            scratch_shapes=[pltpu.VMEM((tm, tn), jnp.float32)],
        ),
        compiler_params=_cparams(("parallel", "parallel", "arbitrary")),
    )(x, w, b.reshape(1, N))


# ------------------------------ attention kernel ------------------------------
def _attention_kernel(q_ref, k_ref, v_ref, o_ref, w_ref, o_acc,
                      *, heads_per_block, d_head):
    # q block: (1, tq, hg*dh); k/v blocks: (1, S, hg*dh); weights block
    # (1, hg, tq, S). Heads within the group are sliced statically.
    scale = 1.0 / math.sqrt(d_head)
    q = q_ref[0]  # (tq, hg*dh) bf16
    k = k_ref[0]  # (S,  hg*dh) bf16
    v = v_ref[0]  # (S,  hg*dh) bf16

    for h in range(heads_per_block):
        c0 = h * d_head
        qh = q[:, c0:c0 + d_head]
        kh = k[:, c0:c0 + d_head]
        vh = v[:, c0:c0 + d_head]

        # scores = (q @ k^T) / sqrt(dh): bf16 operands, f32 accumulation.
        s = lax.dot_general(qh, kh, (((1,), (1,)), ((), ())),
                            preferred_element_type=jnp.float32) * scale

        # f32 softmax (weights are returned and checked against the reference).
        m = jnp.max(s, axis=-1, keepdims=True)
        e = jnp.exp(s - m)
        denom = jnp.sum(e, axis=-1, keepdims=True)
        p = e * pl.reciprocal(denom, approx=True)

        # Dropout(p=0.1) is identity in eval mode.
        w_ref[0, h] = p
        o_acc[:, c0:c0 + d_head] = jnp.dot(
            p.astype(jnp.bfloat16), vh, preferred_element_type=jnp.float32)

    # single lane-dense (tq, hg*dh) store
    o_ref[0] = o_acc[...].astype(o_ref.dtype)


def attention(qp, kp, vp, *, num_heads, tq_pref=256, out_dtype=jnp.bfloat16):
    """qp/kp/vp: (B, S, D) -> (out (B, S, D), weights (B, H, S, S))."""
    B, S, D = qp.shape
    assert D % num_heads == 0, "d_model must be divisible by num_heads"
    dh = D // num_heads
    hg = _pick_head_group(num_heads, dh)      # heads per grid step
    hd = hg * dh                              # lane width of one head group
    n_hg = num_heads // hg
    tq = _pick_tile(S, tq_pref, minimum=128)
    grid = (B, n_hg, S // tq)                 # K/V block index constant over q-tiles

    kernel = functools.partial(_attention_kernel,
                               heads_per_block=hg, d_head=dh)
    return pl.pallas_call(
        kernel,
        out_shape=(
            jax.ShapeDtypeStruct((B, S, D), out_dtype),
            jax.ShapeDtypeStruct((B, num_heads, S, S), jnp.float32),
        ),
        grid_spec=pltpu.PrefetchScalarGridSpec(
            num_scalar_prefetch=0,
            grid=grid,
            in_specs=[
                pl.BlockSpec((1, tq, hd), lambda b, g, qi: (b, qi, g)),
                pl.BlockSpec((1, S, hd), lambda b, g, qi: (b, 0, g)),
                pl.BlockSpec((1, S, hd), lambda b, g, qi: (b, 0, g)),
            ],
            out_specs=[
                pl.BlockSpec((1, tq, hd), lambda b, g, qi: (b, qi, g)),
                pl.BlockSpec((1, hg, tq, S), lambda b, g, qi: (b, g, qi, 0)),
            ],
            scratch_shapes=[pltpu.VMEM((tq, hd), jnp.float32)],
        ),
        compiler_params=_cparams(("parallel", "parallel", "parallel")),
    )(qp, kp, vp)


# ------------------------------- MHA forward ----------------------------------
def mha_forward(params, q, k, v, *, num_heads):
    B, S, D = q.shape
    assert D % num_heads == 0, "d_model must be divisible by num_heads"
    M = B * S

    qp, kp, vp = qkv_projection(
        q.reshape(M, D), k.reshape(M, D), v.reshape(M, D),
        params["w_qkv"], params["b_qkv"],
    )

    attn_out, weight = attention(
        qp.reshape(B, S, D), kp.reshape(B, S, D), vp.reshape(B, S, D),
        num_heads=num_heads,
    )

    out = linear(attn_out.reshape(M, D), params["wo"], params["bo"]).reshape(B, S, D)
    return out, weight


# ---------------------------- reference & init --------------------------------
def mha_reference(params, q, k, v, num_heads):
    B, S, D = q.shape
    dh = D // num_heads

    def lin(x, w, b):
        return jnp.einsum("bsd,de->bse", x, w) + b

    qp = lin(q, params["w_qkv"][0], params["b_qkv"][0, 0])
    kp = lin(k, params["w_qkv"][1], params["b_qkv"][1, 0])
    vp = lin(v, params["w_qkv"][2], params["b_qkv"][2, 0])
    qh = qp.reshape(B, S, num_heads, dh).transpose(0, 2, 1, 3)
    kh = kp.reshape(B, S, num_heads, dh).transpose(0, 2, 1, 3)
    vh = vp.reshape(B, S, num_heads, dh).transpose(0, 2, 1, 3)
    s = jnp.einsum("bhqd,bhkd->bhqk", qh, kh) / math.sqrt(dh)
    w = jax.nn.softmax(s, axis=-1)
    o = jnp.einsum("bhqk,bhkd->bhqd", w, vh).transpose(0, 2, 1, 3).reshape(B, S, D)
    out = jnp.einsum("bsd,de->bse", o, params["wo"]) + params["bo"]
    return out, w


def init_params(key, d_model, num_heads):
    del num_heads  # head count is a static arg, not a traced param
    keys = jax.random.split(key, 8)
    scale = 1.0 / math.sqrt(d_model)

    def lin(kw, kb):
        w = jax.random.uniform(kw, (d_model, d_model), jnp.float32, -scale, scale)
        b = jax.random.uniform(kb, (d_model,), jnp.float32, -scale, scale)
        return w, b

    wq, bq = lin(keys[0], keys[1])
    wk, bk = lin(keys[2], keys[3])
    wv, bv = lin(keys[4], keys[5])
    wo, bo = lin(keys[6], keys[7])
    return dict(
        w_qkv=jnp.stack([wq, wk, wv]),              # (3, D, D)
        b_qkv=jnp.stack([bq, bk, bv])[:, None, :],  # (3, 1, D)
        wo=wo, bo=bo,
    )


if __name__ == "__main__":
    B, S, D, H = 2, 8, 32, 4

    key = jax.random.PRNGKey(0)
    kq, kk_, kv, kp = jax.random.split(key, 4)
    q = jax.random.normal(kq, (B, S, D), jnp.float32)
    k = jax.random.normal(kk_, (B, S, D), jnp.float32)
    v = jax.random.normal(kv, (B, S, D), jnp.float32)

    params = init_params(kp, D, H)

    fwd = jax.jit(mha_forward, static_argnames=("num_heads",))
    out, weight = fwd(params, q, k, v, num_heads=H)
    jax.block_until_ready((out, weight))

    assert out.shape == (B, S, D)
    assert weight.shape == (B, H, S, S)
    # softmax rows must sum to ~1 (approx reciprocal used for normalization)
    assert jnp.allclose(jnp.sum(weight, axis=-1), 1.0, atol=1e-2)

    # compare against a pure-JAX f32 reference (bf16 MXU operands / bf16
    # intermediates loosen parity vs the previous all-f32 version)
    ref_out, ref_w = mha_reference(params, q, k, v, H)
    assert jnp.allclose(out, ref_out, atol=5e-2, rtol=5e-2)
    assert jnp.allclose(weight, ref_w, atol=2e-2, rtol=2e-2)

    print("KERNEL_OK")
</pallas_src>

<mosaic_0001>
module attributes {stable_mosaic.version = 11 : i64} {
  func.func @_linear_kernel(%arg0: i32, %arg1: i32, %arg2: i32, %arg3: memref<16x32xbf16, #tpu.memory_space<vmem>>, %arg4: memref<32x32xf32, #tpu.memory_space<vmem>>, %arg5: memref<1x32xf32, #tpu.memory_space<vmem>>, %arg6: memref<16x32xf32, #tpu.memory_space<vmem>>, %arg7: memref<16x32xf32, #tpu.memory_space<vmem>>) attributes {dimension_semantics = [#tpu.dimension_semantics<parallel>, #tpu.dimension_semantics<parallel>, #tpu.dimension_semantics<arbitrary>], iteration_bounds = array<i64: 1, 1, 1>, scalar_prefetch = 0 : i64, scratch_operands = 1 : i64, tpu.core_type = #tpu.core_type<tc>, window_params = [{transform_indices = @transform_0, window_bounds = array<i64: 16, 32>}, {transform_indices = @transform_1, window_bounds = array<i64: 32, 32>}, {transform_indices = @transform_2, window_bounds = array<i64: 1, 32>}, {transform_indices = @transform_3, window_bounds = array<i64: 16, 32>}]} {
    %c0_i32 = arith.constant 0 : i32
    %0 = arith.cmpi eq, %arg2, %c0_i32 : i32
    %1 = arith.extui %0 : i1 to i32
    %c0_i32_0 = arith.constant 0 : i32
    %2 = arith.cmpi ne, %1, %c0_i32_0 : i32
    scf.if %2 {
      %cst_10 = arith.constant 0.000000e+00 : f32
      %13 = vector.broadcast %cst_10 : f32 to vector<16x32xf32>
      %c0_11 = arith.constant 0 : index
      %c0_12 = arith.constant 0 : index
      %14 = vector.load %arg7[%c0_11, %c0_12] : memref<16x32xf32, #tpu.memory_space<vmem>>, vector<16x32xf32>
      tpu.vector_store %arg7[%c0_11, %c0_12], %13 {strides = array<i32>} : memref<16x32xf32, #tpu.memory_space<vmem>>, vector<16x32xf32>,
    } else {
    }
    %c0 = arith.constant 0 : index
    %c0_1 = arith.constant 0 : index
    %3 = vector.load %arg7[%c0, %c0_1] : memref<16x32xf32, #tpu.memory_space<vmem>>, vector<16x32xf32>
    %c0_2 = arith.constant 0 : index
    %c0_3 = arith.constant 0 : index
    %4 = vector.load %arg3[%c0_2, %c0_3] : memref<16x32xbf16, #tpu.memory_space<vmem>>, vector<16x32xbf16>
    %c0_4 = arith.constant 0 : index
    %c0_5 = arith.constant 0 : index
    %5 = vector.load %arg4[%c0_4, %c0_5] : memref<32x32xf32, #tpu.memory_space<vmem>>, vector<32x32xf32>
    %6 = arith.truncf %5 : vector<32x32xf32> to vector<32x32xbf16>
    %cst = arith.constant dense<0.000000e+00> : vector<16x32xf32>
    %7 = tpu.matmul %4, %6, %cst {dimension_numbers = #tpu.dot_dimension_numbers<[1], [0], [0], [1], [0, 0, 1, 1], [], []>} : vector<16x32xbf16>, vector<32x32xbf16>, vector<16x32xf32> -> vector<16x32xf32>
    %8 = arith.addf %3, %7 : vector<16x32xf32>
    %c0_6 = arith.constant 0 : index
    %c0_7 = arith.constant 0 : index
    %9 = vector.load %arg7[%c0_6, %c0_7] : memref<16x32xf32, #tpu.memory_space<vmem>>, vector<16x32xf32>
    tpu.vector_store %arg7[%c0_6, %c0_7], %8 {strides = array<i32>} : memref<16x32xf32, #tpu.memory_space<vmem>>, vector<16x32xf32>,
    %c0_i32_8 = arith.constant 0 : i32
    %10 = arith.cmpi eq, %arg2, %c0_i32_8 : i32
    %11 = arith.extui %10 : i1 to i32
    %c0_i32_9 = arith.constant 0 : i32
    %12 = arith.cmpi ne, %11, %c0_i32_9 : i32
    scf.if %12 {
      %c0_10 = arith.constant 0 : index
      %c0_11 = arith.constant 0 : index
      %13 = vector.load %arg7[%c0_10, %c0_11] : memref<16x32xf32, #tpu.memory_space<vmem>>, vector<16x32xf32>
      %c0_12 = arith.constant 0 : index
      %c0_13 = arith.constant 0 : index
      %14 = vector.load %arg5[%c0_12, %c0_13] : memref<1x32xf32, #tpu.memory_space<vmem>>, vector<1x32xf32>
      %15 = vector.broadcast %14 : vector<1x32xf32> to vector<16x32xf32>
      %16 = arith.addf %13, %15 : vector<16x32xf32>
      %c0_14 = arith.constant 0 : index
      %c0_15 = arith.constant 0 : index
      %17 = vector.load %arg6[%c0_14, %c0_15] : memref<16x32xf32, #tpu.memory_space<vmem>>, vector<16x32xf32>
      tpu.vector_store %arg6[%c0_14, %c0_15], %16 {strides = array<i32>} : memref<16x32xf32, #tpu.memory_space<vmem>>, vector<16x32xf32>,
    } else {
    }
    return
  }
  func.func @transform_0(%arg0: i32, %arg1: i32, %arg2: i32) -> (i32, i32) {
    %c0_i32 = arith.constant 0 : i32
    return %arg0, %arg2 : i32, i32
  }
  func.func @transform_1(%arg0: i32, %arg1: i32, %arg2: i32) -> (i32, i32) {
    %c0_i32 = arith.constant 0 : i32
    return %arg2, %arg1 : i32, i32
  }
  func.func @transform_2(%arg0: i32, %arg1: i32, %arg2: i32) -> (i32, i32) {
    %c0_i32 = arith.constant 0 : i32
    %c0_i32_0 = arith.constant 0 : i32
    return %c0_i32, %arg1 : i32, i32
  }
  func.func @transform_3(%arg0: i32, %arg1: i32, %arg2: i32) -> (i32, i32) {
    %c0_i32 = arith.constant 0 : i32
    return %arg0, %arg1 : i32, i32
  }
}

module attributes {stable_mosaic.version = 11 : i64} {
  func.func @_attention_kernel(%arg0: i32, %arg1: i32, %arg2: i32, %arg3: memref<1x8x32xbf16, #tpu.memory_space<vmem>>, %arg4: memref<1x8x32xbf16, #tpu.memory_space<vmem>>, %arg5: memref<1x8x32xbf16, #tpu.memory_space<vmem>>, %arg6: memref<1x8x32xbf16, #tpu.memory_space<vmem>>, %arg7: memref<1x4x8x8xf32, #tpu.memory_space<vmem>>, %arg8: memref<8x32xf32, #tpu.memory_space<vmem>>) attributes {dimension_semantics = [#tpu.dimension_semantics<parallel>, #tpu.dimension_semantics<parallel>, #tpu.dimension_semantics<parallel>], iteration_bounds = array<i64: 2, 1, 1>, scalar_prefetch = 0 : i64, scratch_operands = 1 : i64, tpu.core_type = #tpu.core_type<tc>, window_params = [{transform_indices = @transform_0, window_bounds = array<i64: 1, 8, 32>}, {transform_indices = @transform_1, window_bounds = array<i64: 1, 8, 32>}, {transform_indices = @transform_2, window_bounds = array<i64: 1, 8, 32>}, {transform_indices = @transform_3, window_bounds = array<i64: 1, 8, 32>}, {transform_indices = @transform_4, window_bounds = array<i64: 1, 4, 8, 8>}]} {
    %c0 = arith.constant 0 : index
    %c0_0 = arith.constant 0 : index
    %c0_1 = arith.constant 0 : index
    %0 = vector.load %arg3[%c0, %c0_0, %c0_1] : memref<1x8x32xbf16, #tpu.memory_space<vmem>>, vector<1x8x32xbf16>
    %1 = vector.shape_cast %0 : vector<1x8x32xbf16> to vector<8x32xbf16>
    %c0_2 = arith.constant 0 : index
    %c0_3 = arith.constant 0 : index
    %c0_4 = arith.constant 0 : index
    %2 = vector.load %arg4[%c0_2, %c0_3, %c0_4] : memref<1x8x32xbf16, #tpu.memory_space<vmem>>, vector<1x8x32xbf16>
    %3 = vector.shape_cast %2 : vector<1x8x32xbf16> to vector<8x32xbf16>
    %c0_5 = arith.constant 0 : index
    %c0_6 = arith.constant 0 : index
    %c0_7 = arith.constant 0 : index
    %4 = vector.load %arg5[%c0_5, %c0_6, %c0_7] : memref<1x8x32xbf16, #tpu.memory_space<vmem>>, vector<1x8x32xbf16>
    %5 = vector.shape_cast %4 : vector<1x8x32xbf16> to vector<8x32xbf16>
    %6 = vector.extract_strided_slice %1 {offsets = [0, 0], sizes = [8, 8], strides = [1, 1]} : vector<8x32xbf16> to vector<8x8xbf16>
    %7 = vector.extract_strided_slice %3 {offsets = [0, 0], sizes = [8, 8], strides = [1, 1]} : vector<8x32xbf16> to vector<8x8xbf16>
    %8 = vector.extract_strided_slice %5 {offsets = [0, 0], sizes = [8, 8], strides = [1, 1]} : vector<8x32xbf16> to vector<8x8xbf16>
    %cst = arith.constant dense<0.000000e+00> : vector<8x8xf32>
    %9 = tpu.matmul %6, %7, %cst {dimension_numbers = #tpu.dot_dimension_numbers<[1], [1], [0], [0], [0, 0, 1, 0], [], []>} : vector<8x8xbf16>, vector<8x8xbf16>, vector<8x8xf32> -> vector<8x8xf32>
    %cst_8 = arith.constant 0.353553385 : f32
    %10 = vector.broadcast %cst_8 : f32 to vector<8x8xf32>
    %11 = arith.mulf %9, %10 : vector<8x8xf32>
    %cst_9 = arith.constant dense<0xFF800000> : vector<8xf32>
    %12 = vector.multi_reduction <maximumf>, %11, %cst_9 [1] : vector<8x8xf32> to vector<8xf32>
    %13 = vector.shape_cast %12 : vector<8xf32> to vector<8x1xf32>
    %14 = vector.broadcast %13 : vector<8x1xf32> to vector<8x8xf32>
    %15 = arith.subf %11, %14 : vector<8x8xf32>
    %16 = math.exp %15 : vector<8x8xf32>
    %cst_10 = arith.constant dense<0.000000e+00> : vector<8xf32>
    %17 = vector.multi_reduction <add>, %16, %cst_10 [1] : vector<8x8xf32> to vector<8xf32>
    %18 = vector.shape_cast %17 : vector<8xf32> to vector<8x1xf32>
    %19 = tpu.reciprocal %18 {approx = true} : vector<8x1xf32> -> vector<8x1xf32>
    %20 = vector.broadcast %19 : vector<8x1xf32> to vector<8x8xf32>
    %21 = arith.mulf %16, %20 : vector<8x8xf32>
    %c0_11 = arith.constant 0 : index
    %c0_12 = arith.constant 0 : index
    %c0_13 = arith.constant 0 : index
    %c0_14 = arith.constant 0 : index
    %22 = vector.load %arg7[%c0_11, %c0_12, %c0_13, %c0_14] : memref<1x4x8x8xf32, #tpu.memory_space<vmem>>, vector<1x1x8x8xf32>
    %23 = vector.shape_cast %22 : vector<1x1x8x8xf32> to vector<8x8xf32>
    %24 = vector.shape_cast %21 : vector<8x8xf32> to vector<1x1x8x8xf32>
    tpu.vector_store %arg7[%c0_11, %c0_12, %c0_13, %c0_14], %24 {strides = array<i32>} : memref<1x4x8x8xf32, #tpu.memory_space<vmem>>, vector<1x1x8x8xf32>,
    %25 = arith.truncf %21 : vector<8x8xf32> to vector<8x8xbf16>
    %cst_15 = arith.constant dense<0.000000e+00> : vector<8x8xf32>
    %26 = tpu.matmul %25, %8, %cst_15 {dimension_numbers = #tpu.dot_dimension_numbers<[1], [0], [0], [1], [0, 0, 1, 1], [], []>} : vector<8x8xbf16>, vector<8x8xbf16>, vector<8x8xf32> -> vector<8x8xf32>
    %c0_16 = arith.constant 0 : index
    %c0_17 = arith.constant 0 : index
    %27 = vector.load %arg8[%c0_16, %c0_17] : memref<8x32xf32, #tpu.memory_space<vmem>>, vector<8x8xf32>
    tpu.vector_store %arg8[%c0_16, %c0_17], %26 {strides = array<i32>} : memref<8x32xf32, #tpu.memory_space<vmem>>, vector<8x8xf32>,
    %28 = vector.extract_strided_slice %1 {offsets = [0, 8], sizes = [8, 8], strides = [1, 1]} : vector<8x32xbf16> to vector<8x8xbf16>
    %29 = vector.extract_strided_slice %3 {offsets = [0, 8], sizes = [8, 8], strides = [1, 1]} : vector<8x32xbf16> to vector<8x8xbf16>
    %30 = vector.extract_strided_slice %5 {offsets = [0, 8], sizes = [8, 8], strides = [1, 1]} : vector<8x32xbf16> to vector<8x8xbf16>
    %cst_18 = arith.constant dense<0.000000e+00> : vector<8x8xf32>
    %31 = tpu.matmul %28, %29, %cst_18 {dimension_numbers = #tpu.dot_dimension_numbers<[1], [1], [0], [0], [0, 0, 1, 0], [], []>} : vector<8x8xbf16>, vector<8x8xbf16>, vector<8x8xf32> -> vector<8x8xf32>
    %cst_19 = arith.constant 0.353553385 : f32
    %32 = vector.broadcast %cst_19 : f32 to vector<8x8xf32>
    %33 = arith.mulf %31, %32 : vector<8x8xf32>
    %cst_20 = arith.constant dense<0xFF800000> : vector<8xf32>
    %34 = vector.multi_reduction <maximumf>, %33, %cst_20 [1] : vector<8x8xf32> to vector<8xf32>
    %35 = vector.shape_cast %34 : vector<8xf32> to vector<8x1xf32>
    %36 = vector.broadcast %35 : vector<8x1xf32> to vector<8x8xf32>
    %37 = arith.subf %33, %36 : vector<8x8xf32>
    %38 = math.exp %37 : vector<8x8xf32>
    %cst_21 = arith.constant dense<0.000000e+00> : vector<8xf32>
    %39 = vector.multi_reduction <add>, %38, %cst_21 [1] : vector<8x8xf32> to vector<8xf32>
    %40 = vector.shape_cast %39 : vector<8xf32> to vector<8x1xf32>
    %41 = tpu.reciprocal %40 {approx = true} : vector<8x1xf32> -> vector<8x1xf32>
    %42 = vector.broadcast %41 : vector<8x1xf32> to vector<8x8xf32>
    %43 = arith.mulf %38, %42 : vector<8x8xf32>
    %c0_22 = arith.constant 0 : index
    %c1 = arith.constant 1 : index
    %c0_23 = arith.constant 0 : index
    %c0_24 = arith.constant 0 : index
    %44 = vector.load %arg7[%c0_22, %c1, %c0_23, %c0_24] : memref<1x4x8x8xf32, #tpu.memory_space<vmem>>, vector<1x1x8x8xf32>
    %45 = vector.shape_cast %44 : vector<1x1x8x8xf32> to vector<8x8xf32>
    %46 = vector.shape_cast %43 : vector<8x8xf32> to vector<1x1x8x8xf32>
    tpu.vector_store %arg7[%c0_22, %c1, %c0_23, %c0_24], %46 {strides = array<i32>} : memref<1x4x8x8xf32, #tpu.memory_space<vmem>>, vector<1x1x8x8xf32>,
    %47 = arith.truncf %43 : vector<8x8xf32> to vector<8x8xbf16>
    %cst_25 = arith.constant dense<0.000000e+00> : vector<8x8xf32>
    %48 = tpu.matmul %47, %30, %cst_25 {dimension_numbers = #tpu.dot_dimension_numbers<[1], [0], [0], [1], [0, 0, 1, 1], [], []>} : vector<8x8xbf16>, vector<8x8xbf16>, vector<8x8xf32> -> vector<8x8xf32>
    %c0_26 = arith.constant 0 : index
    %c8 = arith.constant 8 : index
    %49 = vector.load %arg8[%c0_26, %c8] : memref<8x32xf32, #tpu.memory_space<vmem>>, vector<8x8xf32>
    tpu.vector_store %arg8[%c0_26, %c8], %48 {strides = array<i32>} : memref<8x32xf32, #tpu.memory_space<vmem>>, vector<8x8xf32>,
    %50 = vector.extract_strided_slice %1 {offsets = [0, 16], sizes = [8, 8], strides = [1, 1]} : vector<8x32xbf16> to vector<8x8xbf16>
    %51 = vector.extract_strided_slice %3 {offsets = [0, 16], sizes = [8, 8], strides = [1, 1]} : vector<8x32xbf16> to vector<8x8xbf16>
    %52 = vector.extract_strided_slice %5 {offsets = [0, 16], sizes = [8, 8], strides = [1, 1]} : vector<8x32xbf16> to vector<8x8xbf16>
    %cst_27 = arith.constant dense<0.000000e+00> : vector<8x8xf32>
    %53 = tpu.matmul %50, %51, %cst_27 {dimension_numbers = #tpu.dot_dimension_numbers<[1], [1], [0], [0], [0, 0, 1, 0], [], []>} : vector<8x8xbf16>, vector<8x8xbf16>, vector<8x8xf32> -> vector<8x8xf32>
    %cst_28 = arith.constant 0.353553385 : f32
    %54 = vector.broadcast %cst_28 : f32 to vector<8x8xf32>
    %55 = arith.mulf %53, %54 : vector<8x8xf32>
    %cst_29 = arith.constant dense<0xFF800000> : vector<8xf32>
    %56 = vector.multi_reduction <maximumf>, %55, %cst_29 [1] : vector<8x8xf32> to vector<8xf32>
    %57 = vector.shape_cast %56 : vector<8xf32> to vector<8x1xf32>
    %58 = vector.broadcast %57 : vector<8x1xf32> to vector<8x8xf32>
    %59 = arith.subf %55, %58 : vector<8x8xf32>
    %60 = math.exp %59 : vector<8x8xf32>
    %cst_30 = arith.constant dense<0.000000e+00> : vector<8xf32>
    %61 = vector.multi_reduction <add>, %60, %cst_30 [1] : vector<8x8xf32> to vector<8xf32>
    %62 = vector.shape_cast %61 : vector<8xf32> to vector<8x1xf32>
    %63 = tpu.reciprocal %62 {approx = true} : vector<8x1xf32> -> vector<8x1xf32>
    %64 = vector.broadcast %63 : vector<8x1xf32> to vector<8x8xf32>
    %65 = arith.mulf %60, %64 : vector<8x8xf32>
    %c0_31 = arith.constant 0 : index
    %c2 = arith.constant 2 : index
    %c0_32 = arith.constant 0 : index
    %c0_33 = arith.constant 0 : index
    %66 = vector.load %arg7[%c0_31, %c2, %c0_32, %c0_33] : memref<1x4x8x8xf32, #tpu.memory_space<vmem>>, vector<1x1x8x8xf32>
    %67 = vector.shape_cast %66 : vector<1x1x8x8xf32> to vector<8x8xf32>
    %68 = vector.shape_cast %65 : vector<8x8xf32> to vector<1x1x8x8xf32>
    tpu.vector_store %arg7[%c0_31, %c2, %c0_32, %c0_33], %68 {strides = array<i32>} : memref<1x4x8x8xf32, #tpu.memory_space<vmem>>, vector<1x1x8x8xf32>,
    %69 = arith.truncf %65 : vector<8x8xf32> to vector<8x8xbf16>
    %cst_34 = arith.constant dense<0.000000e+00> : vector<8x8xf32>
    %70 = tpu.matmul %69, %52, %cst_34 {dimension_numbers = #tpu.dot_dimension_numbers<[1], [0], [0], [1], [0, 0, 1, 1], [], []>} : vector<8x8xbf16>, vector<8x8xbf16>, vector<8x8xf32> -> vector<8x8xf32>
    %c0_35 = arith.constant 0 : index
    %c16 = arith.constant 16 : index
    %71 = vector.load %arg8[%c0_35, %c16] : memref<8x32xf32, #tpu.memory_space<vmem>>, vector<8x8xf32>
    tpu.vector_store %arg8[%c0_35, %c16], %70 {strides = array<i32>} : memref<8x32xf32, #tpu.memory_space<vmem>>, vector<8x8xf32>,
    %72 = vector.extract_strided_slice %1 {offsets = [0, 24], sizes = [8, 8], strides = [1, 1]} : vector<8x32xbf16> to vector<8x8xbf16>
    %73 = vector.extract_strided_slice %3 {offsets = [0, 24], sizes = [8, 8], strides = [1, 1]} : vector<8x32xbf16> to vector<8x8xbf16>
    %74 = vector.extract_strided_slice %5 {offsets = [0, 24], sizes = [8, 8], strides = [1, 1]} : vector<8x32xbf16> to vector<8x8xbf16>
    %cst_36 = arith.constant dense<0.000000e+00> : vector<8x8xf32>
    %75 = tpu.matmul %72, %73, %cst_36 {dimension_numbers = #tpu.dot_dimension_numbers<[1], [1], [0], [0], [0, 0, 1, 0], [], []>} : vector<8x8xbf16>, vector<8x8xbf16>, vector<8x8xf32> -> vector<8x8xf32>
    %cst_37 = arith.constant 0.353553385 : f32
    %76 = vector.broadcast %cst_37 : f32 to vector<8x8xf32>
    %77 = arith.mulf %75, %76 : vector<8x8xf32>
    %cst_38 = arith.constant dense<0xFF800000> : vector<8xf32>
    %78 = vector.multi_reduction <maximumf>, %77, %cst_38 [1] : vector<8x8xf32> to vector<8xf32>
    %79 = vector.shape_cast %78 : vector<8xf32> to vector<8x1xf32>
    %80 = vector.broadcast %79 : vector<8x1xf32> to vector<8x8xf32>
    %81 = arith.subf %77, %80 : vector<8x8xf32>
    %82 = math.exp %81 : vector<8x8xf32>
    %cst_39 = arith.constant dense<0.000000e+00> : vector<8xf32>
    %83 = vector.multi_reduction <add>, %82, %cst_39 [1] : vector<8x8xf32> to vector<8xf32>
    %84 = vector.shape_cast %83 : vector<8xf32> to vector<8x1xf32>
    %85 = tpu.reciprocal %84 {approx = true} : vector<8x1xf32> -> vector<8x1xf32>
    %86 = vector.broadcast %85 : vector<8x1xf32> to vector<8x8xf32>
    %87 = arith.mulf %82, %86 : vector<8x8xf32>
    %c0_40 = arith.constant 0 : index
    %c3 = arith.constant 3 : index
    %c0_41 = arith.constant 0 : index
    %c0_42 = arith.constant 0 : index
    %88 = vector.load %arg7[%c0_40, %c3, %c0_41, %c0_42] : memref<1x4x8x8xf32, #tpu.memory_space<vmem>>, vector<1x1x8x8xf32>
    %89 = vector.shape_cast %88 : vector<1x1x8x8xf32> to vector<8x8xf32>
    %90 = vector.shape_cast %87 : vector<8x8xf32> to vector<1x1x8x8xf32>
    tpu.vector_store %arg7[%c0_40, %c3, %c0_41, %c0_42], %90 {strides = array<i32>} : memref<1x4x8x8xf32, #tpu.memory_space<vmem>>, vector<1x1x8x8xf32>,
    %91 = arith.truncf %87 : vector<8x8xf32> to vector<8x8xbf16>
    %cst_43 = arith.constant dense<0.000000e+00> : vector<8x8xf32>
    %92 = tpu.matmul %91, %74, %cst_43 {dimension_numbers = #tpu.dot_dimension_numbers<[1], [0], [0], [1], [0, 0, 1, 1], [], []>} : vector<8x8xbf16>, vector<8x8xbf16>, vector<8x8xf32> -> vector<8x8xf32>
    %c0_44 = arith.constant 0 : index
    %c24 = arith.constant 24 : index
    %93 = vector.load %arg8[%c0_44, %c24] : memref<8x32xf32, #tpu.memory_space<vmem>>, vector<8x8xf32>
    tpu.vector_store %arg8[%c0_44, %c24], %92 {strides = array<i32>} : memref<8x32xf32, #tpu.memory_space<vmem>>, vector<8x8xf32>,
    %c0_45 = arith.constant 0 : index
    %c0_46 = arith.constant 0 : index
    %94 = vector.load %arg8[%c0_45, %c0_46] : memref<8x32xf32, #tpu.memory_space<vmem>>, vector<8x32xf32>
    %95 = arith.truncf %94 : vector<8x32xf32> to vector<8x32xbf16>
    %c0_47 = arith.constant 0 : index
    %c0_48 = arith.constant 0 : index
    %c0_49 = arith.constant 0 : index
    %96 = vector.load %arg6[%c0_47, %c0_48, %c0_49] : memref<1x8x32xbf16, #tpu.memory_space<vmem>>, vector<1x8x32xbf16>
    %97 = vector.shape_cast %96 : vector<1x8x32xbf16> to vector<8x32xbf16>
    %98 = vector.shape_cast %95 : vector<8x32xbf16> to vector<1x8x32xbf16>
    tpu.vector_store %arg6[%c0_47, %c0_48, %c0_49], %98 {strides = array<i32>} : memref<1x8x32xbf16, #tpu.memory_space<vmem>>, vector<1x8x32xbf16>,
    return
  }
  func.func @transform_0(%arg0: i32, %arg1: i32, %arg2: i32) -> (i32, i32, i32) {
    %c0_i32 = arith.constant 0 : i32
    return %arg0, %arg2, %arg1 : i32, i32, i32
  }
  func.func @transform_1(%arg0: i32, %arg1: i32, %arg2: i32) -> (i32, i32, i32) {
    %c0_i32 = arith.constant 0 : i32
    %c0_i32_0 = arith.constant 0 : i32
    return %arg0, %c0_i32, %arg1 : i32, i32, i32
  }
  func.func @transform_2(%arg0: i32, %arg1: i32, %arg2: i32) -> (i32, i32, i32) {
    %c0_i32 = arith.constant 0 : i32
    %c0_i32_0 = arith.constant 0 : i32
    return %arg0, %c0_i32, %arg1 : i32, i32, i32
  }
  func.func @transform_3(%arg0: i32, %arg1: i32, %arg2: i32) -> (i32, i32, i32) {
    %c0_i32 = arith.constant 0 : i32
    return %arg0, %arg2, %arg1 : i32, i32, i32
  }
  func.func @transform_4(%arg0: i32, %arg1: i32, %arg2: i32) -> (i32, i32, i32, i32) {
    %c0_i32 = arith.constant 0 : i32
    %c0_i32_0 = arith.constant 0 : i32
    return %arg0, %arg1, %arg2, %c0_i32 : i32, i32, i32, i32
  }
}

module attributes {stable_mosaic.version = 11 : i64} {
  func.func @_qkv_proj_kernel(%arg0: i32, %arg1: i32, %arg2: i32, %arg3: memref<16x32xf32, #tpu.memory_space<vmem>>, %arg4: memref<16x32xf32, #tpu.memory_space<vmem>>, %arg5: memref<16x32xf32, #tpu.memory_space<vmem>>, %arg6: memref<3x32x32xf32, #tpu.memory_space<vmem>>, %arg7: memref<3x1x32xf32, #tpu.memory_space<vmem>>, %arg8: memref<16x32xbf16, #tpu.memory_space<vmem>>, %arg9: memref<16x32xbf16, #tpu.memory_space<vmem>>, %arg10: memref<16x32xbf16, #tpu.memory_space<vmem>>, %arg11: memref<3x16x32xf32, #tpu.memory_space<vmem>>) attributes {dimension_semantics = [#tpu.dimension_semantics<parallel>, #tpu.dimension_semantics<parallel>, #tpu.dimension_semantics<arbitrary>], iteration_bounds = array<i64: 1, 1, 1>, scalar_prefetch = 0 : i64, scratch_operands = 1 : i64, tpu.core_type = #tpu.core_type<tc>, window_params = [{transform_indices = @transform_0, window_bounds = array<i64: 16, 32>}, {transform_indices = @transform_1, window_bounds = array<i64: 16, 32>}, {transform_indices = @transform_2, window_bounds = array<i64: 16, 32>}, {transform_indices = @transform_3, window_bounds = array<i64: 3, 32, 32>}, {transform_indices = @transform_4, window_bounds = array<i64: 3, 1, 32>}, {transform_indices = @transform_5, window_bounds = array<i64: 16, 32>}, {transform_indices = @transform_6, window_bounds = array<i64: 16, 32>}, {transform_indices = @transform_7, window_bounds = array<i64: 16, 32>}]} {
    %c0_i32 = arith.constant 0 : i32
    %0 = arith.cmpi eq, %arg2, %c0_i32 : i32
    %1 = arith.extui %0 : i1 to i32
    %c0_i32_0 = arith.constant 0 : i32
    %2 = arith.cmpi ne, %1, %c0_i32_0 : i32
    scf.if %2 {
      %cst_35 = arith.constant 0.000000e+00 : f32
      %42 = vector.broadcast %cst_35 : f32 to vector<3x16x32xf32>
      %c0_36 = arith.constant 0 : index
      %c0_37 = arith.constant 0 : index
      %c0_38 = arith.constant 0 : index
      %43 = vector.load %arg11[%c0_36, %c0_37, %c0_38] : memref<3x16x32xf32, #tpu.memory_space<vmem>>, vector<3x16x32xf32>
      tpu.vector_store %arg11[%c0_36, %c0_37, %c0_38], %42 {strides = array<i32>} : memref<3x16x32xf32, #tpu.memory_space<vmem>>, vector<3x16x32xf32>,
    } else {
    }
    %c0 = arith.constant 0 : index
    %c0_1 = arith.constant 0 : index
    %3 = vector.load %arg3[%c0, %c0_1] : memref<16x32xf32, #tpu.memory_space<vmem>>, vector<16x32xf32>
    %4 = arith.truncf %3 : vector<16x32xf32> to vector<16x32xbf16>
    %c0_2 = arith.constant 0 : index
    %c0_3 = arith.constant 0 : index
    %5 = vector.load %arg4[%c0_2, %c0_3] : memref<16x32xf32, #tpu.memory_space<vmem>>, vector<16x32xf32>
    %6 = arith.truncf %5 : vector<16x32xf32> to vector<16x32xbf16>
    %c0_4 = arith.constant 0 : index
    %c0_5 = arith.constant 0 : index
    %7 = vector.load %arg5[%c0_4, %c0_5] : memref<16x32xf32, #tpu.memory_space<vmem>>, vector<16x32xf32>
    %8 = arith.truncf %7 : vector<16x32xf32> to vector<16x32xbf16>
    %c0_6 = arith.constant 0 : index
    %c0_7 = arith.constant 0 : index
    %c0_8 = arith.constant 0 : index
    %9 = vector.load %arg11[%c0_6, %c0_7, %c0_8] : memref<3x16x32xf32, #tpu.memory_space<vmem>>, vector<1x16x32xf32>
    %10 = vector.shape_cast %9 : vector<1x16x32xf32> to vector<16x32xf32>
    %c0_9 = arith.constant 0 : index
    %c0_10 = arith.constant 0 : index
    %c0_11 = arith.constant 0 : index
    %11 = vector.load %arg6[%c0_9, %c0_10, %c0_11] : memref<3x32x32xf32, #tpu.memory_space<vmem>>, vector<1x32x32xf32>
    %12 = vector.shape_cast %11 : vector<1x32x32xf32> to vector<32x32xf32>
    %13 = arith.truncf %12 : vector<32x32xf32> to vector<32x32xbf16>
    %cst = arith.constant dense<0.000000e+00> : vector<16x32xf32>
    %14 = tpu.matmul %4, %13, %cst {dimension_numbers = #tpu.dot_dimension_numbers<[1], [0], [0], [1], [0, 0, 1, 1], [], []>} : vector<16x32xbf16>, vector<32x32xbf16>, vector<16x32xf32> -> vector<16x32xf32>
    %15 = arith.addf %10, %14 : vector<16x32xf32>
    %c0_12 = arith.constant 0 : index
    %c0_13 = arith.constant 0 : index
    %c0_14 = arith.constant 0 : index
    %16 = vector.load %arg11[%c0_12, %c0_13, %c0_14] : memref<3x16x32xf32, #tpu.memory_space<vmem>>, vector<1x16x32xf32>
    %17 = vector.shape_cast %16 : vector<1x16x32xf32> to vector<16x32xf32>
    %18 = vector.shape_cast %15 : vector<16x32xf32> to vector<1x16x32xf32>
    tpu.vector_store %arg11[%c0_12, %c0_13, %c0_14], %18 {strides = array<i32>} : memref<3x16x32xf32, #tpu.memory_space<vmem>>, vector<1x16x32xf32>,
    %c1 = arith.constant 1 : index
    %c0_15 = arith.constant 0 : index
    %c0_16 = arith.constant 0 : index
    %19 = vector.load %arg11[%c1, %c0_15, %c0_16] : memref<3x16x32xf32, #tpu.memory_space<vmem>>, vector<1x16x32xf32>
    %20 = vector.shape_cast %19 : vector<1x16x32xf32> to vector<16x32xf32>
    %c1_17 = arith.constant 1 : index
    %c0_18 = arith.constant 0 : index
    %c0_19 = arith.constant 0 : index
    %21 = vector.load %arg6[%c1_17, %c0_18, %c0_19] : memref<3x32x32xf32, #tpu.memory_space<vmem>>, vector<1x32x32xf32>
    %22 = vector.shape_cast %21 : vector<1x32x32xf32> to vector<32x32xf32>
    %23 = arith.truncf %22 : vector<32x32xf32> to vector<32x32xbf16>
    %cst_20 = arith.constant dense<0.000000e+00> : vector<16x32xf32>
    %24 = tpu.matmul %6, %23, %cst_20 {dimension_numbers = #tpu.dot_dimension_numbers<[1], [0], [0], [1], [0, 0, 1, 1], [], []>} : vector<16x32xbf16>, vector<32x32xbf16>, vector<16x32xf32> -> vector<16x32xf32>
    %25 = arith.addf %20, %24 : vector<16x32xf32>
    %c1_21 = arith.constant 1 : index
    %c0_22 = arith.constant 0 : index
    %c0_23 = arith.constant 0 : index
    %26 = vector.load %arg11[%c1_21, %c0_22, %c0_23] : memref<3x16x32xf32, #tpu.memory_space<vmem>>, vector<1x16x32xf32>
    %27 = vector.shape_cast %26 : vector<1x16x32xf32> to vector<16x32xf32>
    %28 = vector.shape_cast %25 : vector<16x32xf32> to vector<1x16x32xf32>
    tpu.vector_store %arg11[%c1_21, %c0_22, %c0_23], %28 {strides = array<i32>} : memref<3x16x32xf32, #tpu.memory_space<vmem>>, vector<1x16x32xf32>,
    %c2 = arith.constant 2 : index
    %c0_24 = arith.constant 0 : index
    %c0_25 = arith.constant 0 : index
    %29 = vector.load %arg11[%c2, %c0_24, %c0_25] : memref<3x16x32xf32, #tpu.memory_space<vmem>>, vector<1x16x32xf32>
    %30 = vector.shape_cast %29 : vector<1x16x32xf32> to vector<16x32xf32>
    %c2_26 = arith.constant 2 : index
    %c0_27 = arith.constant 0 : index
    %c0_28 = arith.constant 0 : index
    %31 = vector.load %arg6[%c2_26, %c0_27, %c0_28] : memref<3x32x32xf32, #tpu.memory_space<vmem>>, vector<1x32x32xf32>
    %32 = vector.shape_cast %31 : vector<1x32x32xf32> to vector<32x32xf32>
    %33 = arith.truncf %32 : vector<32x32xf32> to vector<32x32xbf16>
    %cst_29 = arith.constant dense<0.000000e+00> : vector<16x32xf32>
    %34 = tpu.matmul %8, %33, %cst_29 {dimension_numbers = #tpu.dot_dimension_numbers<[1], [0], [0], [1], [0, 0, 1, 1], [], []>} : vector<16x32xbf16>, vector<32x32xbf16>, vector<16x32xf32> -> vector<16x32xf32>
    %35 = arith.addf %30, %34 : vector<16x32xf32>
    %c2_30 = arith.constant 2 : index
    %c0_31 = arith.constant 0 : index
    %c0_32 = arith.constant 0 : index
    %36 = vector.load %arg11[%c2_30, %c0_31, %c0_32] : memref<3x16x32xf32, #tpu.memory_space<vmem>>, vector<1x16x32xf32>
    %37 = vector.shape_cast %36 : vector<1x16x32xf32> to vector<16x32xf32>
    %38 = vector.shape_cast %35 : vector<16x32xf32> to vector<1x16x32xf32>
    tpu.vector_store %arg11[%c2_30, %c0_31, %c0_32], %38 {strides = array<i32>} : memref<3x16x32xf32, #tpu.memory_space<vmem>>, vector<1x16x32xf32>,
    %c0_i32_33 = arith.constant 0 : i32
    %39 = arith.cmpi eq, %arg2, %c0_i32_33 : i32
    %40 = arith.extui %39 : i1 to i32
    %c0_i32_34 = arith.constant 0 : i32
    %41 = arith.cmpi ne, %40, %c0_i32_34 : i32
    scf.if %41 {
      %c0_35 = arith.constant 0 : index
      %c0_36 = arith.constant 0 : index
      %c0_37 = arith.constant 0 : index
      %42 = vector.load %arg11[%c0_35, %c0_36, %c0_37] : memref<3x16x32xf32, #tpu.memory_space<vmem>>, vector<1x16x32xf32>
      %43 = vector.shape_cast %42 : vector<1x16x32xf32> to vector<16x32xf32>
      %c0_38 = arith.constant 0 : index
      %c0_39 = arith.constant 0 : index
      %c0_40 = arith.constant 0 : index
      %44 = vector.load %arg7[%c0_38, %c0_39, %c0_40] : memref<3x1x32xf32, #tpu.memory_space<vmem>>, vector<1x1x32xf32>
      %45 = vector.shape_cast %44 : vector<1x1x32xf32> to vector<1x32xf32>
      %46 = vector.broadcast %45 : vector<1x32xf32> to vector<16x32xf32>
      %47 = arith.addf %43, %46 : vector<16x32xf32>
      %48 = arith.truncf %47 : vector<16x32xf32> to vector<16x32xbf16>
      %c0_41 = arith.constant 0 : index
      %c0_42 = arith.constant 0 : index
      %49 = vector.load %arg8[%c0_41, %c0_42] : memref<16x32xbf16, #tpu.memory_space<vmem>>, vector<16x32xbf16>
      tpu.vector_store %arg8[%c0_41, %c0_42], %48 {strides = array<i32>} : memref<16x32xbf16, #tpu.memory_space<vmem>>, vector<16x32xbf16>,
      %c1_43 = arith.constant 1 : index
      %c0_44 = arith.constant 0 : index
      %c0_45 = arith.constant 0 : index
      %50 = vector.load %arg11[%c1_43, %c0_44, %c0_45] : memref<3x16x32xf32, #tpu.memory_space<vmem>>, vector<1x16x32xf32>
      %51 = vector.shape_cast %50 : vector<1x16x32xf32> to vector<16x32xf32>
      %c1_46 = arith.constant 1 : index
      %c0_47 = arith.constant 0 : index
      %c0_48 = arith.constant 0 : index
      %52 = vector.load %arg7[%c1_46, %c0_47, %c0_48] : memref<3x1x32xf32, #tpu.memory_space<vmem>>, vector<1x1x32xf32>
      %53 = vector.shape_cast %52 : vector<1x1x32xf32> to vector<1x32xf32>
      %54 = vector.broadcast %53 : vector<1x32xf32> to vector<16x32xf32>
      %55 = arith.addf %51, %54 : vector<16x32xf32>
      %56 = arith.truncf %55 : vector<16x32xf32> to vector<16x32xbf16>
      %c0_49 = arith.constant 0 : index
      %c0_50 = arith.constant 0 : index
      %57 = vector.load %arg9[%c0_49, %c0_50] : memref<16x32xbf16, #tpu.memory_space<vmem>>, vector<16x32xbf16>
      tpu.vector_store %arg9[%c0_49, %c0_50], %56 {strides = array<i32>} : memref<16x32xbf16, #tpu.memory_space<vmem>>, vector<16x32xbf16>,
      %c2_51 = arith.constant 2 : index
      %c0_52 = arith.constant 0 : index
      %c0_53 = arith.constant 0 : index
      %58 = vector.load %arg11[%c2_51, %c0_52, %c0_53] : memref<3x16x32xf32, #tpu.memory_space<vmem>>, vector<1x16x32xf32>
      %59 = vector.shape_cast %58 : vector<1x16x32xf32> to vector<16x32xf32>
      %c2_54 = arith.constant 2 : index
      %c0_55 = arith.constant 0 : index
      %c0_56 = arith.constant 0 : index
      %60 = vector.load %arg7[%c2_54, %c0_55, %c0_56] : memref<3x1x32xf32, #tpu.memory_space<vmem>>, vector<1x1x32xf32>
      %61 = vector.shape_cast %60 : vector<1x1x32xf32> to vector<1x32xf32>
      %62 = vector.broadcast %61 : vector<1x32xf32> to vector<16x32xf32>
      %63 = arith.addf %59, %62 : vector<16x32xf32>
      %64 = arith.truncf %63 : vector<16x32xf32> to vector<16x32xbf16>
      %c0_57 = arith.constant 0 : index
      %c0_58 = arith.constant 0 : index
      %65 = vector.load %arg10[%c0_57, %c0_58] : memref<16x32xbf16, #tpu.memory_space<vmem>>, vector<16x32xbf16>
      tpu.vector_store %arg10[%c0_57, %c0_58], %64 {strides = array<i32>} : memref<16x32xbf16, #tpu.memory_space<vmem>>, vector<16x32xbf16>,
    } else {
    }
    return
  }
  func.func @transform_0(%arg0: i32, %arg1: i32, %arg2: i32) -> (i32, i32) {
    %c0_i32 = arith.constant 0 : i32
    return %arg0, %arg2 : i32, i32
  }
  func.func @transform_1(%arg0: i32, %arg1: i32, %arg2: i32) -> (i32, i32) {
    %c0_i32 = arith.constant 0 : i32
    return %arg0, %arg2 : i32, i32
  }
  func.func @transform_2(%arg0: i32, %arg1: i32, %arg2: i32) -> (i32, i32) {
    %c0_i32 = arith.constant 0 : i32
    return %arg0, %arg2 : i32, i32
  }
  func.func @transform_3(%arg0: i32, %arg1: i32, %arg2: i32) -> (i32, i32, i32) {
    %c0_i32 = arith.constant 0 : i32
    %c0_i32_0 = arith.constant 0 : i32
    return %c0_i32, %arg2, %arg1 : i32, i32, i32
  }
  func.func @transform_4(%arg0: i32, %arg1: i32, %arg2: i32) -> (i32, i32, i32) {
    %c0_i32 = arith.constant 0 : i32
    %c0_i32_0 = arith.constant 0 : i32
    %c0_i32_1 = arith.constant 0 : i32
    return %c0_i32, %c0_i32_0, %arg1 : i32, i32, i32
  }
  func.func @transform_5(%arg0: i32, %arg1: i32, %arg2: i32) -> (i32, i32) {
    %c0_i32 = arith.constant 0 : i32
    return %arg0, %arg1 : i32, i32
  }
  func.func @transform_6(%arg0: i32, %arg1: i32, %arg2: i32) -> (i32, i32) {
    %c0_i32 = arith.constant 0 : i32
    return %arg0, %arg1 : i32, i32
  }
  func.func @transform_7(%arg0: i32, %arg1: i32, %arg2: i32) -> (i32, i32) {
    %c0_i32 = arith.constant 0 : i32
    return %arg0, %arg1 : i32, i32
  }
}

</mosaic_0001>

<llo_original>
// kernel: mha_forward.5
$region0: #{mha_forward.5}
  #allocation0 [shape = 'u32[]', space=smem, size = 0x4, offset = 0x4, fixed_abs, tag = 'smem constant byte address 0x4 - core index']
  #allocation1 [shape = 'u32[144,128]{1,0:T(1,128)}', space=vmem, size = 0x12000, scoped, tag = 'internal scratch']
  #allocation2 [shape = 'f32[16,32]{1,0:T(8,128)}', space=vmem, size = 0x2000, scoped, tag = 'scratch operand']
  %s0 = inlined_call_operand.vmem [shape: bf16[16,32], index: 0, kind: input, shape index: {}]
  %s1 = inlined_call_operand.vmem [shape: f32[32,32], index: 1, kind: input, shape index: {}]
  %s2 = inlined_call_operand.vmem [shape: f32[1,32], index: 2, kind: input, shape index: {}]
  %s3 = inlined_call_operand.hbm [shape: f32[16,32], index: 3, kind: output, shape index: {}]
  %s4 = sld [smem:[#allocation0]]
  $region30: #{mha_forward.5} parent=0
    _
  %s6 = ssub.s32 1, %s4
  %s7 = scalar_select 0, %s6, %s4
  $region1: #{mha_forward.5} parent=0
    #allocation3 [shape = 'u8[8192]{0}', space=vmem, size = 0x2000, scoped, tag = 'output window, operand 0, single buffered']
    #allocation4 [shape = 's32[1]{0}', space=sflag, size = 0x4, scoped, tag = 'scoped memory for mha_forward.5']
    %8 = vsyncpa [#allocation4], 0
    // Predicated region
    $region2: #{mha_forward.5} parent=1 // pred_check
      _
    $region3: #{mha_forward.5} parent=1 // pred_check_branch
      %10 = sbr.rel (0) target = $region5
    $region4: #{mha_forward.5} parent=1 // pred_region
      _
    $region5: #{mha_forward.5} parent=1 // pred_fallthru
      _
    // Predicated region
    $region6: #{mha_forward.5} parent=1 // pred_check
      _
    $region7: #{mha_forward.5} parent=1 // pred_check_branch
      %12 = sbr.rel (0) target = $region9
    $region8: #{mha_forward.5} parent=1 // pred_region
      _
    $region9: #{mha_forward.5} parent=1 // pred_fallthru
      _
    // Predicated region
    $region10: #{mha_forward.5} parent=1 // pred_check
      _
    $region11: #{mha_forward.5} parent=1 // pred_check_branch
      %14 = sbr.rel (0) target = $region13
    $region12: #{mha_forward.5} parent=1 // pred_region
      _
    $region13: #{mha_forward.5} parent=1 // pred_fallthru
      _
    %p16 = scmp.eq.s32.totalorder 0, 0
    // Predicated region
    $region14: #{mha_forward.5} parent=1 // pred_check
      %p17 = pneg %p16
    $region15: #{mha_forward.5} parent=1 // pred_check_branch
      %19 = sbr.rel (%p17) target = $region17
    $region16: #{mha_forward.5} parent=1 // pred_region
      %vm20 = vcmask 261120
      %21 = vst.msk [vmem:[#allocation2] sm:$0xff] %vm20, 0.0
      %22 = vst.msk [vmem:[#allocation2 + $0x8] sm:$0xff] %vm20, 0.0
    $region17: #{mha_forward.5} parent=1 // pred_fallthru
      _
    %v23 = vld [vmem:[#allocation2] sm:$0xff]
    %v24 = vld [vmem:[#allocation2 + $0x8] sm:$0xff]
    %v25 = vld [vmem:[%s0] sm:$0xf]
    %v26 = vld [vmem:[%s0 + $0x4] sm:$0xf]
    %v27 = vld [vmem:[%s1] sm:$0xff]
    %v28 = vld [vmem:[%s1 + $0x8] sm:$0xff]
    %v29 = vld [vmem:[%s1 + $0x10] sm:$0xff]
    %v30 = vld [vmem:[%s1 + $0x18] sm:$0xff]
    %v31 = vpack.c.bf16 %v28, %v27
    %v32 = vpack.c.bf16 %v30, %v29
    %v35 = vunpack.c.l.b16 %v25
    %v36 = vunpack.c.l.b16 %v26
    %v37 = vpack.c.b16 %v36, %v35
    %vm38 = vcmask 261120
    %v40 = vsel %vm38, %v37, 0
    %42 = vmatprep.subr.bf16.mxu0 0
    %43 = vmatpush1.bf16.msra.mxu0 0
    %44 = vmatprep.subr.bf16.mxu0 0
    %45 = vmatpush1.bf16.msra.mxu0 0
    %46 = vmatprep.subr.bf16.mxu0 0
    %47 = vmatpush1.bf16.msra.mxu0 0
    %48 = vmatprep.subr.bf16.mxu0 0
    %49 = vmatpush1.bf16.msra.mxu0 0
    %50 = vmatprep.subr.bf16.mxu0 0
    %51 = vmatpush1.bf16.msra.mxu0 0
    %52 = vmatprep.subr.bf16.mxu0 0
    %53 = vmatpush1.bf16.msra.mxu0 0
    %54 = vmatprep.subr.bf16.mxu0 0
    %55 = vmatpush1.bf16.msra.mxu0 %v32
    %56 = vmatprep.subr.bf16.mxu0 0
    %57 = vmatpush1.bf16.msra.mxu0 %v31
    %58 = vmatprep.subr.bf16.mxu0 0
    %59 = vmatpush2.bf16.msra.mxu0 0
    %60 = vmatprep.subr.bf16.mxu0 0
    %61 = vmatpush2.bf16.msra.mxu0 0
    %62 = vmatprep.subr.bf16.mxu0 0
    %63 = vmatpush2.bf16.msra.mxu0 0
    %64 = vmatprep.subr.bf16.mxu0 0
    %65 = vmatpush2.bf16.msra.mxu0 0
    %66 = vmatprep.subr.bf16.mxu0 0
    %67 = vmatpush2.bf16.msra.mxu0 0
    %68 = vmatprep.subr.bf16.mxu0 0
    %69 = vmatpush2.bf16.msra.mxu0 0
    %70 = vmatprep.subr.bf16.mxu0 0
    %71 = vmatpush2.bf16.msra.mxu0 0
    %72 = vmatprep.subr.bf16.mxu0 0
    %73 = vmatpush2.bf16.msra.mxu0 0
    %74 = vmatprep.mubr.bf16.mxu0 0
    %75 = vmatmul.mubr.bf16.gmra.mxu0 %v40
    %v76 = vpop.f32.mrf.mxu0
    %v77 = vadd.f32 0.0, %v76
    %v78 = vpop.f32.mrf.mxu0
    %v79 = vpop.f32.mrf.mxu0
    %v80 = vadd.f32 0.0, %v79
    %v81 = vpop.f32.mrf.mxu0
    %82 = vdwg.mxu0
    %v83 = vadd.f32 %v23, %v77
    %v84 = vadd.f32 %v24, %v80
    %85 = vst.msk [vmem:[#allocation2] sm:$0xff] %vm38, %v83
    %86 = vst.msk [vmem:[#allocation2 + $0x8] sm:$0xff] %vm38, %v84
    // Predicated region
    $region18: #{mha_forward.5} parent=1 // pred_check
      %p87 = pneg %p16
    $region19: #{mha_forward.5} parent=1 // pred_check_branch
      %89 = sbr.rel (%p87) target = $region21
    $region20: #{mha_forward.5} parent=1 // pred_region
      %v90 = vld [vmem:[#allocation2] sm:$0xff]
      %v91 = vld [vmem:[#allocation2 + $0x8] sm:$0xff]
      %v92 = vld [vmem:[%s2] sm:$0x1]
      %v94 = vlaneseq
      %v95 = vshrl.u32 %v94, 7
      %v96 = vsub.s32 0, %v95
      %v97 = vrot.slane %v92, %v96
      %v99 = vadd.f32 %v90, %v97
      %v100 = vadd.f32 %v91, %v97
      %101 = vst.msk [vmem:[#allocation3] sm:$0xff] %vm38, %v99
      %102 = vst.msk [vmem:[#allocation3 + $0x8] sm:$0xff] %vm38, %v100
    $region21: #{mha_forward.5} parent=1 // pred_fallthru
      _
    // Predicated region
    $region22: #{mha_forward.5} parent=1 // pred_check
      _
    $region23: #{mha_forward.5} parent=1 // pred_check_branch
      %104 = sbr.rel (0) target = $region25
    $region24: #{mha_forward.5} parent=1 // pred_region
      %s106 = ssub.s32 256, 256
      %107 = vsyncadd [#allocation4], %s106
      %s108 = sshll.u32 [#allocation3], 4
      %s109 = int_to_ptr.vmem [resolvable:$true] %s108
      %114 = dma.vmem_to_hbm [thread:$0]  %s109, 256, %s3, [#allocation4], 128, 128, 8
    $region25: #{mha_forward.5} parent=1 // pred_fallthru
      _
    // Predicated region
    $region26: #{mha_forward.5} parent=1 // pred_check
      _
    $region27: #{mha_forward.5} parent=1 // pred_check_branch
      %116 = sbr.rel (0) target = $region29
    $region28: #{mha_forward.5} parent=1 // pred_region
      %117 = dma.done [#allocation4], 256
    $region29: #{mha_forward.5} parent=1 // pred_fallthru
      _
    %118 = vsyncpa [#allocation4], 1

// kernel: mha_forward.3
$region0: #{mha_forward.3}
  #allocation0 [shape = 'u32[]', space=smem, size = 0x4, offset = 0x4, fixed_abs, tag = 'smem constant byte address 0x4 - core index']
  #allocation1 [shape = 'u32[144,128]{1,0:T(1,128)}', space=vmem, size = 0x12000, scoped, tag = 'internal scratch']
  #allocation2 [shape = 'f32[3,16,32]{2,1,0:T(8,128)}', space=vmem, size = 0x6000, scoped, tag = 'scratch operand']
  %s0 = inlined_call_operand.hbm [shape: f32[16,32], index: 0, kind: input, shape index: {}]
  %s1 = inlined_call_operand.vmem [shape: f32[16,32], index: 1, kind: input, shape index: {}]
  %s2 = inlined_call_operand.hbm [shape: f32[16,32], index: 2, kind: input, shape index: {}]
  %s3 = inlined_call_operand.hbm [shape: f32[3,32,32], index: 3, kind: input, shape index: {}]
  %s4 = inlined_call_operand.hbm [shape: f32[3,1,32], index: 4, kind: input, shape index: {}]
  %s5 = inlined_call_operand.vmem [shape: bf16[16,32], index: 5, kind: output, shape index: {0}]
  %s6 = inlined_call_operand.vmem [shape: bf16[16,32], index: 6, kind: output, shape index: {1}]
  %s7 = inlined_call_operand.vmem [shape: bf16[16,32], index: 7, kind: output, shape index: {2}]
  %8 = xla_tuple %s5, %s6, %s7
  %s9 = sld [smem:[#allocation0]]
  $region70: #{mha_forward.3} parent=0
    _
  %s11 = ssub.s32 1, %s9
  %s12 = scalar_select 0, %s11, %s9
  $region1: #{mha_forward.3} parent=0
    #allocation3 [shape = 'u8[8192]{0}', space=vmem, size = 0x2000, scoped, tag = 'input window, operand 0, single buffered']
    #allocation4 [shape = 's32[1]{0}', space=sflag, size = 0x4, scoped, tag = 'scoped memory for mha_forward.3']
    #allocation5 [shape = 'u8[8192]{0}', space=vmem, size = 0x2000, scoped, tag = 'input window, operand 2, single buffered']
    #allocation6 [shape = 's32[1]{0}', space=sflag, size = 0x4, scoped, tag = 'scoped memory for mha_forward.3']
    #allocation7 [shape = 'u8[49152]{0}', space=vmem, size = 0xc000, scoped, tag = 'input window, operand 3, single buffered']
    #allocation8 [shape = 'u8[1536]{0}', space=vmem, size = 0x800, scoped, tag = 'input window, operand 4, single buffered']
    #allocation9 [shape = 's32[1]{0}', space=sflag, size = 0x4, scoped, tag = 'scoped memory for mha_forward.3']
    %13 = vsyncpa [#allocation4], 0
    %14 = vsyncpa [#allocation6], 0
    %15 = vsyncpa [#allocation9], 0
    // Predicated region
    $region2: #{mha_forward.3} parent=1 // pred_check
      _
    $region3: #{mha_forward.3} parent=1 // pred_check_branch
      %17 = sbr.rel (0) target = $region5
    $region4: #{mha_forward.3} parent=1 // pred_region
      %s19 = ssub.s32 256, 256
      %20 = vsyncadd [#allocation4], %s19
      %s21 = sshll.u32 [#allocation3], 4
      %s22 = int_to_ptr.vmem [resolvable:$true] %s21
      %27 = dma.hbm_to_vmem [thread:$0]  %s0, 256, %s22, [#allocation4], 128, 128, 8
    $region5: #{mha_forward.3} parent=1 // pred_fallthru
      _
    // Predicated region
    $region6: #{mha_forward.3} parent=1 // pred_check
      _
    $region7: #{mha_forward.3} parent=1 // pred_check_branch
      %29 = sbr.rel (0) target = $region9
    $region8: #{mha_forward.3} parent=1 // pred_region
      _
    $region9: #{mha_forward.3} parent=1 // pred_fallthru
      _
    // Predicated region
    $region10: #{mha_forward.3} parent=1 // pred_check
      _
    $region11: #{mha_forward.3} parent=1 // pred_check_branch
      %31 = sbr.rel (0) target = $region13
    $region12: #{mha_forward.3} parent=1 // pred_region
      %s33 = ssub.s32 256, 256
      %34 = vsyncadd [#allocation6], %s33
      %s35 = sshll.u32 [#allocation5], 4
      %s36 = int_to_ptr.vmem [resolvable:$true] %s35
      %41 = dma.hbm_to_vmem [thread:$0]  %s2, 256, %s36, [#allocation6], 128, 128, 8
    $region13: #{mha_forward.3} parent=1 // pred_fallthru
      _
    // Predicated region
    $region14: #{mha_forward.3} parent=1 // pred_check
      _
    $region15: #{mha_forward.3} parent=1 // pred_check_branch
      %43 = sbr.rel (0) target = $region17
    $region16: #{mha_forward.3} parent=1 // pred_region
      %s45 = ssub.s32 1536, 1536
      %46 = vsyncadd [#allocation6], %s45
      %s47 = sshll.u32 [#allocation7], 4
      %s48 = int_to_ptr.vmem [resolvable:$true] %s47
      %53 = dma.hbm_to_vmem [thread:$0]  %s3, 1536, %s48, [#allocation6], 128, 128, 8
    $region17: #{mha_forward.3} parent=1 // pred_fallthru
      _
    // Predicated region
    $region18: #{mha_forward.3} parent=1 // pred_check
      _
    $region19: #{mha_forward.3} parent=1 // pred_check_branch
      %55 = sbr.rel (0) target = $region21
    $region20: #{mha_forward.3} parent=1 // pred_region
      %s57 = ssub.s32 48, 48
      %58 = vsyncadd [#allocation9], %s57
      %s59 = sshll.u32 [#allocation8], 4
      %s60 = int_to_ptr.vmem [resolvable:$true] %s59
      %65 = dma.hbm_to_vmem [thread:$0]  %s4, 48, %s60, [#allocation9], 16, 16, 1
    $region21: #{mha_forward.3} parent=1 // pred_fallthru
      _
    // Predicated region
    $region22: #{mha_forward.3} parent=1 // pred_check
      _
    $region23: #{mha_forward.3} parent=1 // pred_check_branch
      %67 = sbr.rel (0) target = $region25
    $region24: #{mha_forward.3} parent=1 // pred_region
      %68 = dma.done [#allocation4], 256
    $region25: #{mha_forward.3} parent=1 // pred_fallthru
      _
    // Predicated region
    $region26: #{mha_forward.3} parent=1 // pred_check
      _
    $region27: #{mha_forward.3} parent=1 // pred_check_branch
      %70 = sbr.rel (0) target = $region29
    $region28: #{mha_forward.3} parent=1 // pred_region
      %71 = dma.done [#allocation6], 256
    $region29: #{mha_forward.3} parent=1 // pred_fallthru
      _
    // Predicated region
    $region30: #{mha_forward.3} parent=1 // pred_check
      _
    $region31: #{mha_forward.3} parent=1 // pred_check_branch
      %73 = sbr.rel (0) target = $region33
    $region32: #{mha_forward.3} parent=1 // pred_region
      %74 = dma.done [#allocation6], 1536
    $region33: #{mha_forward.3} parent=1 // pred_fallthru
      _
    // Predicated region
    $region34: #{mha_forward.3} parent=1 // pred_check
      _
    $region35: #{mha_forward.3} parent=1 // pred_check_branch
      %76 = sbr.rel (0) target = $region37
    $region36: #{mha_forward.3} parent=1 // pred_region
      %77 = dma.done [#allocation9], 48
    $region37: #{mha_forward.3} parent=1 // pred_fallthru
      _
    %p79 = scmp.eq.s32.totalorder 0, 0
    // Predicated region
    $region38: #{mha_forward.3} parent=1 // pred_check
      %p80 = pneg %p79
    $region39: #{mha_forward.3} parent=1 // pred_check_branch
      %82 = sbr.rel (%p80) target = $region41
    $region40: #{mha_forward.3} parent=1 // pred_region
      %vm83 = vcmask 261120
      %84 = vst.msk [vmem:[#allocation2] sm:$0xff] %vm83, 0.0
      %85 = vst.msk [vmem:[#allocation2 + $0x8] sm:$0xff] %vm83, 0.0
      %86 = vst.msk [vmem:[#allocation2 + $0x10] sm:$0xff] %vm83, 0.0
      %87 = vst.msk [vmem:[#allocation2 + $0x18] sm:$0xff] %vm83, 0.0
      %88 = vst.msk [vmem:[#allocation2 + $0x20] sm:$0xff] %vm83, 0.0
      %89 = vst.msk [vmem:[#allocation2 + $0x28] sm:$0xff] %vm83, 0.0
    $region41: #{mha_forward.3} parent=1 // pred_fallthru
      _
    %v90 = vld [vmem:[#allocation3] sm:$0xff]
    %v91 = vld [vmem:[#allocation3 + $0x8] sm:$0xff]
    %v92 = vpack.c.bf16 %v91, %v90
    %v93 = vld [vmem:[%s1] sm:$0xff]
    %v94 = vld [vmem:[%s1 + $0x8] sm:$0xff]
    %v95 = vpack.c.bf16 %v94, %v93
    %v96 = vld [vmem:[#allocation5] sm:$0xff]
    %v97 = vld [vmem:[#allocation5 + $0x8] sm:$0xff]
    %v98 = vpack.c.bf16 %v97, %v96
    %v99 = vld [vmem:[#allocation2] sm:$0xff]
    %v100 = vld [vmem:[#allocation2 + $0x8] sm:$0xff]
    %v101 = vld [vmem:[#allocation7] sm:$0xff]
    %v102 = vld [vmem:[#allocation7 + $0x8] sm:$0xff]
    %v103 = vld [vmem:[#allocation7 + $0x10] sm:$0xff]
    %v104 = vld [vmem:[#allocation7 + $0x18] sm:$0xff]
    %v105 = vpack.c.bf16 %v102, %v101
    %v106 = vpack.c.bf16 %v104, %v103
    %vm107 = vcmask 261120
    %v109 = vsel %vm107, %v92, 0
    %111 = vmatprep.subr.bf16.mxu0 0
    %112 = vmatpush1.bf16.msra.mxu0 0
    %113 = vmatprep.subr.bf16.mxu0 0
    %114 = vmatpush1.bf16.msra.mxu0 0
    %115 = vmatprep.subr.bf16.mxu0 0
    %116 = vmatpush1.bf16.msra.mxu0 0
    %117 = vmatprep.subr.bf16.mxu0 0
    %118 = vmatpush1.bf16.msra.mxu0 0
    %119 = vmatprep.subr.bf16.mxu0 0
    %120 = vmatpush1.bf16.msra.mxu0 0
    %121 = vmatprep.subr.bf16.mxu0 0
    %122 = vmatpush1.bf16.msra.mxu0 0
    %123 = vmatprep.subr.bf16.mxu0 0
    %124 = vmatpush1.bf16.msra.mxu0 %v106
    %125 = vmatprep.subr.bf16.mxu0 0
    %126 = vmatpush1.bf16.msra.mxu0 %v105
    %127 = vmatprep.subr.bf16.mxu0 0
    %128 = vmatpush2.bf16.msra.mxu0 0
    %129 = vmatprep.subr.bf16.mxu0 0
    %130 = vmatpush2.bf16.msra.mxu0 0
    %131 = vmatprep.subr.bf16.mxu0 0
    %132 = vmatpush2.bf16.msra.mxu0 0
    %133 = vmatprep.subr.bf16.mxu0 0
    %134 = vmatpush2.bf16.msra.mxu0 0
    %135 = vmatprep.subr.bf16.mxu0 0
    %136 = vmatpush2.bf16.msra.mxu0 0
    %137 = vmatprep.subr.bf16.mxu0 0
    %138 = vmatpush2.bf16.msra.mxu0 0
    %139 = vmatprep.subr.bf16.mxu0 0
    %140 = vmatpush2.bf16.msra.mxu0 0
    %141 = vmatprep.subr.bf16.mxu0 0
    %142 = vmatpush2.bf16.msra.mxu0 0
    %143 = vmatprep.mubr.bf16.mxu0 0
    %144 = vmatmul.mubr.bf16.gmra.mxu0 %v109
    %v145 = vpop.f32.mrf.mxu0
    %v146 = vadd.f32 0.0, %v145
    %v147 = vpop.f32.mrf.mxu0
    %v148 = vpop.f32.mrf.mxu0
    %v149 = vadd.f32 0.0, %v148
    %v150 = vpop.f32.mrf.mxu0
    %151 = vdwg.mxu0
    %v152 = vadd.f32 %v99, %v146
    %v153 = vadd.f32 %v100, %v149
    %154 = vst.msk [vmem:[#allocation2] sm:$0xff] %vm107, %v152
    %155 = vst.msk [vmem:[#allocation2 + $0x8] sm:$0xff] %vm107, %v153
    %s156 = scalar_lea.vmem [#allocation2], 16
    %v157 = vld [vmem:[%s156] sm:$0xff]
    %v158 = vld [vmem:[%s156 + $0x8] sm:$0xff]
    %s159 = scalar_lea.vmem [#allocation7], 32
    %v160 = vld [vmem:[%s159] sm:$0xff]
    %v161 = vld [vmem:[%s159 + $0x8] sm:$0xff]
    %v162 = vld [vmem:[%s159 + $0x10] sm:$0xff]
    %v163 = vld [vmem:[%s159 + $0x18] sm:$0xff]
    %v164 = vpack.c.bf16 %v161, %v160
    %v165 = vpack.c.bf16 %v163, %v162
    %v167 = vsel %vm107, %v95, 0
    %169 = vmatprep.subr.bf16.mxu0 0
    %170 = vmatpush1.bf16.msra.mxu0 0
    %171 = vmatprep.subr.bf16.mxu0 0
    %172 = vmatpush1.bf16.msra.mxu0 0
    %173 = vmatprep.subr.bf16.mxu0 0
    %174 = vmatpush1.bf16.msra.mxu0 0
    %175 = vmatprep.subr.bf16.mxu0 0
    %176 = vmatpush1.bf16.msra.mxu0 0
    %177 = vmatprep.subr.bf16.mxu0 0
    %178 = vmatpush1.bf16.msra.mxu0 0
    %179 = vmatprep.subr.bf16.mxu0 0
    %180 = vmatpush1.bf16.msra.mxu0 0
    %181 = vmatprep.subr.bf16.mxu0 0
    %182 = vmatpush1.bf16.msra.mxu0 %v165
    %183 = vmatprep.subr.bf16.mxu0 0
    %184 = vmatpush1.bf16.msra.mxu0 %v164
    %185 = vmatprep.subr.bf16.mxu0 0
    %186 = vmatpush2.bf16.msra.mxu0 0
    %187 = vmatprep.subr.bf16.mxu0 0
    %188 = vmatpush2.bf16.msra.mxu0 0
    %189 = vmatprep.subr.bf16.mxu0 0
    %190 = vmatpush2.bf16.msra.mxu0 0
    %191 = vmatprep.subr.bf16.mxu0 0
    %192 = vmatpush2.bf16.msra.mxu0 0
    %193 = vmatprep.subr.bf16.mxu0 0
    %194 = vmatpush2.bf16.msra.mxu0 0
    %195 = vmatprep.subr.bf16.mxu0 0
    %196 = vmatpush2.bf16.msra.mxu0 0
    %197 = vmatprep.subr.bf16.mxu0 0
    %198 = vmatpush2.bf16.msra.mxu0 0
    %199 = vmatprep.subr.bf16.mxu0 0
    %200 = vmatpush2.bf16.msra.mxu0 0
    %201 = vmatprep.mubr.bf16.mxu0 0
    %202 = vmatmul.mubr.bf16.gmra.mxu0 %v167
    %v203 = vpop.f32.mrf.mxu0
    %v204 = vadd.f32 0.0, %v203
    %v205 = vpop.f32.mrf.mxu0
    %v206 = vpop.f32.mrf.mxu0
    %v207 = vadd.f32 0.0, %v206
    %v208 = vpop.f32.mrf.mxu0
    %209 = vdwg.mxu0
    %v210 = vadd.f32 %v157, %v204
    %v211 = vadd.f32 %v158, %v207
    %212 = vst.msk [vmem:[%s156] sm:$0xff] %vm107, %v210
    %213 = vst.msk [vmem:[%s156 + $0x8] sm:$0xff] %vm107, %v211
    %s214 = scalar_lea.vmem [#allocation2], 32
    %v215 = vld [vmem:[%s214] sm:$0xff]
    %v216 = vld [vmem:[%s214 + $0x8] sm:$0xff]
    %s217 = scalar_lea.vmem [#allocation7], 64
    %v218 = vld [vmem:[%s217] sm:$0xff]
    %v219 = vld [vmem:[%s217 + $0x8] sm:$0xff]
    %v220 = vld [vmem:[%s217 + $0x10] sm:$0xff]
    %v221 = vld [vmem:[%s217 + $0x18] sm:$0xff]
    %v222 = vpack.c.bf16 %v219, %v218
    %v223 = vpack.c.bf16 %v221, %v220
    %v225 = vsel %vm107, %v98, 0
    %227 = vmatprep.subr.bf16.mxu0 0
    %228 = vmatpush1.bf16.msra.mxu0 0
    %229 = vmatprep.subr.bf16.mxu0 0
    %230 = vmatpush1.bf16.msra.mxu0 0
    %231 = vmatprep.subr.bf16.mxu0 0
    %232 = vmatpush1.bf16.msra.mxu0 0
    %233 = vmatprep.subr.bf16.mxu0 0
    %234 = vmatpush1.bf16.msra.mxu0 0
    %235 = vmatprep.subr.bf16.mxu0 0
    %236 = vmatpush1.bf16.msra.mxu0 0
    %237 = vmatprep.subr.bf16.mxu0 0
    %238 = vmatpush1.bf16.msra.mxu0 0
    %239 = vmatprep.subr.bf16.mxu0 0
    %240 = vmatpush1.bf16.msra.mxu0 %v223
    %241 = vmatprep.subr.bf16.mxu0 0
    %242 = vmatpush1.bf16.msra.mxu0 %v222
    %243 = vmatprep.subr.bf16.mxu0 0
    %244 = vmatpush2.bf16.msra.mxu0 0
    %245 = vmatprep.subr.bf16.mxu0 0
    %246 = vmatpush2.bf16.msra.mxu0 0
    %247 = vmatprep.subr.bf16.mxu0 0
    %248 = vmatpush2.bf16.msra.mxu0 0
    %249 = vmatprep.subr.bf16.mxu0 0
    %250 = vmatpush2.bf16.msra.mxu0 0
    %251 = vmatprep.subr.bf16.mxu0 0
    %252 = vmatpush2.bf16.msra.mxu0 0
    %253 = vmatprep.subr.bf16.mxu0 0
    %254 = vmatpush2.bf16.msra.mxu0 0
    %255 = vmatprep.subr.bf16.mxu0 0
    %256 = vmatpush2.bf16.msra.mxu0 0
    %257 = vmatprep.subr.bf16.mxu0 0
    %258 = vmatpush2.bf16.msra.mxu0 0
    %259 = vmatprep.mubr.bf16.mxu0 0
    %260 = vmatmul.mubr.bf16.gmra.mxu0 %v225
    %v261 = vpop.f32.mrf.mxu0
    %v262 = vadd.f32 0.0, %v261
    %v263 = vpop.f32.mrf.mxu0
    %v264 = vpop.f32.mrf.mxu0
    %v265 = vadd.f32 0.0, %v264
    %v266 = vpop.f32.mrf.mxu0
    %267 = vdwg.mxu0
    %v268 = vadd.f32 %v215, %v262
    %v269 = vadd.f32 %v216, %v265
    %270 = vst.msk [vmem:[%s214] sm:$0xff] %vm107, %v268
    %271 = vst.msk [vmem:[%s214 + $0x8] sm:$0xff] %vm107, %v269
    // Predicated region
    $region42: #{mha_forward.3} parent=1 // pred_check
      %p272 = pneg %p79
    $region43: #{mha_forward.3} parent=1 // pred_check_branch
      %274 = sbr.rel (%p272) target = $region45
    $region44: #{mha_forward.3} parent=1 // pred_region
      %v275 = vld [vmem:[#allocation2] sm:$0xff]
      %v276 = vld [vmem:[#allocation2 + $0x8] sm:$0xff]
      %v277 = vld [vmem:[#allocation8] sm:$0x1]
      %v279 = vlaneseq
      %v280 = vshrl.u32 %v279, 7
      %v281 = vsub.s32 0, %v280
      %v282 = vrot.slane %v277, %v281
      %v284 = vadd.f32 %v275, %v282
      %v285 = vadd.f32 %v276, %v282
      %v286 = vpack.c.bf16 %v285, %v284
      %v288 = vunpack.c.l.b16 %v286
      %v289 = vunpack.c.h.b16 %v286
      %v290 = vpack.c.b16 %v288, %v288
      %v291 = vpack.c.b16 %v289, %v289
      %vm294 = vcmask 257024
      %295 = vst.msk [vmem:[%s5] sm:$0xf] %vm294, %v290
      %296 = vst.msk [vmem:[%s5 + $0x4] sm:$0xf] %vm294, %v291
      %v297 = vld [vmem:[%s156] sm:$0xff]
      %v298 = vld [vmem:[%s156 + $0x8] sm:$0xff]
      %s299 = scalar_lea.vmem [#allocation8], 1
      %v300 = vld [vmem:[%s299] sm:$0x1]
      %v302 = vlaneseq
      %v303 = vshrl.u32 %v302, 7
      %v304 = vsub.s32 0, %v303
      %v305 = vrot.slane %v300, %v304
      %v307 = vadd.f32 %v297, %v305
      %v308 = vadd.f32 %v298, %v305
      %v309 = vpack.c.bf16 %v308, %v307
      %v311 = vunpack.c.l.b16 %v309
      %v312 = vunpack.c.h.b16 %v309
      %v313 = vpack.c.b16 %v311, %v311
      %v314 = vpack.c.b16 %v312, %v312
      %317 = vst.msk [vmem:[%s6] sm:$0xf] %vm294, %v313
      %318 = vst.msk [vmem:[%s6 + $0x4] sm:$0xf] %vm294, %v314
      %v319 = vld [vmem:[%s214] sm:$0xff]
      %v320 = vld [vmem:[%s214 + $0x8] sm:$0xff]
      %s321 = scalar_lea.vmem [#allocation8], 2
      %v322 = vld [vmem:[%s321] sm:$0x1]
      %v324 = vlaneseq
      %v325 = vshrl.u32 %v324, 7
      %v326 = vsub.s32 0, %v325
      %v327 = vrot.slane %v322, %v326
      %v329 = vadd.f32 %v319, %v327
      %v330 = vadd.f32 %v320, %v327
      %v331 = vpack.c.bf16 %v330, %v329
      %v333 = vunpack.c.l.b16 %v331
      %v334 = vunpack.c.h.b16 %v331
      %v335 = vpack.c.b16 %v333, %v333
      %v336 = vpack.c.b16 %v334, %v334
      %339 = vst.msk [vmem:[%s7] sm:$0xf] %vm294, %v335
      %340 = vst.msk [vmem:[%s7 + $0x4] sm:$0xf] %vm294, %v336
    $region45: #{mha_forward.3} parent=1 // pred_fallthru
      _
    // Predicated region
    $region46: #{mha_forward.3} parent=1 // pred_check
      _
    $region47: #{mha_forward.3} parent=1 // pred_check_branch
      %342 = sbr.rel (0) target = $region49
    $region48: #{mha_forward.3} parent=1 // pred_region
      _
    $region49: #{mha_forward.3} parent=1 // pred_fallthru
      _
    // Predicated region
    $region50: #{mha_forward.3} parent=1 // pred_check
      _
    $region51: #{mha_forward.3} parent=1 // pred_check_branch
      %344 = sbr.rel (0) target = $region53
    $region52: #{mha_forward.3} parent=1 // pred_region
      _
    $region53: #{mha_forward.3} parent=1 // pred_fallthru
      _
    // Predicated region
    $region54: #{mha_forward.3} parent=1 // pred_check
      _
    $region55: #{mha_forward.3} parent=1 // pred_check_branch
      %346 = sbr.rel (0) target = $region57
    $region56: #{mha_forward.3} parent=1 // pred_region
      _
    $region57: #{mha_forward.3} parent=1 // pred_fallthru
      _
    // Predicated region
    $region58: #{mha_forward.3} parent=1 // pred_check
      _
    $region59: #{mha_forward.3} parent=1 // pred_check_branch
      %348 = sbr.rel (0) target = $region61
    $region60: #{mha_forward.3} parent=1 // pred_region
      _
    $region61: #{mha_forward.3} parent=1 // pred_fallthru
      _
    // Predicated region
    $region62: #{mha_forward.3} parent=1 // pred_check
      _
    $region63: #{mha_forward.3} parent=1 // pred_check_branch
      %350 = sbr.rel (0) target = $region65
    $region64: #{mha_forward.3} parent=1 // pred_region
      _
    $region65: #{mha_forward.3} parent=1 // pred_fallthru
      _
    // Predicated region
    $region66: #{mha_forward.3} parent=1 // pred_check
      _
    $region67: #{mha_forward.3} parent=1 // pred_check_branch
      %352 = sbr.rel (0) target = $region69
    $region68: #{mha_forward.3} parent=1 // pred_region
      _
    $region69: #{mha_forward.3} parent=1 // pred_fallthru
      _
    %353 = vsyncpa [#allocation4], 1
    %354 = vsyncpa [#allocation6], 1
    %355 = vsyncpa [#allocation9], 1

// kernel: mha_forward.4
$region0: #{mha_forward.4}
  #allocation0 [shape = 'u32[]', space=smem, size = 0x4, offset = 0x4, fixed_abs, tag = 'smem constant byte address 0x4 - core index']
  #allocation1 [shape = 'u32[144,128]{1,0:T(1,128)}', space=vmem, size = 0x12000, scoped, tag = 'internal scratch']
  #allocation2 [shape = 'f32[8,32]{1,0:T(8,128)}', space=vmem, size = 0x1000, scoped, tag = 'scratch operand']
  %s0 = inlined_call_operand.vmem [shape: bf16[2,8,32], index: 0, kind: input, shape index: {}]
  %s1 = inlined_call_operand.vmem [shape: bf16[2,8,32], index: 1, kind: input, shape index: {}]
  %s2 = inlined_call_operand.vmem [shape: bf16[2,8,32], index: 2, kind: input, shape index: {}]
  %s3 = inlined_call_operand.vmem [shape: bf16[2,8,32], index: 3, kind: output, shape index: {0}]
  %s4 = inlined_call_operand.hbm [shape: f32[2,4,8,8], index: 4, kind: output, shape index: {1}]
  %5 = xla_tuple %s3, %s4
  %s6 = sld [smem:[#allocation0]]
  $region53: #{mha_forward.4} parent=0
    _
  %s8 = ssub.s32 1, %s6
  %s9 = scalar_select 0, %s8, %s6
  $region1: #{mha_forward.4} parent=0
    #allocation3 [shape = 'u8[32768]{0}', space=vmem, size = 0x8000, scoped, tag = 'output window, operand 1']
    #allocation4 [shape = 's32[2]{0}', space=sflag, size = 0x8, scoped, tag = 'scoped memory for mha_forward.4']
    %10 = vsyncpa [#allocation4], 0
    %s11 = scalar_lea.sflag [#allocation4], 1
    %12 = vsyncpa %s11, 0
    loop: start=0, step=1, limit=4
    $region2: #{mha_forward.4} parent=1 // loop_pre_header
      _
    $region3: #{mha_forward.4} parent=1 // loop_header
      %s14 = sphi 0, %s18
      %p15 = scmp.ge.s32.totalorder %s14, 4
      %s21 = sphi 0, %s40
      %s22 = sphi 0, %s36
      %s23 = sphi 0, %s32
      %s24 = sphi 0, %s21
      %s25 = sphi 0, %s22
      %s26 = sphi 0, %s23
      %s27 = sphi 0, %s24
      %s28 = sphi 0, %s25
      %s29 = sphi 0, %s26
      %s47 = sphi 0, %s49
      %s50 = sphi 0, %s47
      %s51 = sphi 0, %s50
      %s67 = sphi 0, %s51
      %s75 = sphi 0, %s77
      %s78 = sphi 0, %s75
      %s79 = sphi 0, %s78
      %s95 = sphi 0, %s79
      %s103 = sphi 0, %s105
      %s106 = sphi 0, %s103
      %s107 = sphi 0, %s106
      %s123 = sphi 0, %s107
      %s133 = sphi 0, %s135
      %s136 = sphi 0, %s133
      %s137 = sphi 0, %s136
      %s153 = sphi 0, %s137
      %s163 = sphi 0, %s165
      %s166 = sphi 0, %s163
      %s167 = sphi 0, %s166
      %s183 = sphi 0, %s167
    $region4: #{mha_forward.4} parent=1 // loop_header_branch
      %17 = sbr.rel (%p15) target = $region8
    $region5: #{mha_forward.4} parent=1 // loop_body
      %s19 = ssub.s32 %s14, 1
      %s20 = ssub.s32 %s14, 2
      %s30 = sadd.s32 1, %s23
      %p31 = scmp.ge.s32.totalorder %s30, 1
      %s32 = scalar_select %p31, 0, %s30
      %s33 = sadd.s32 1, %s22
      %s34 = scalar_select %p31, %s33, %s22
      %p35 = scmp.ge.s32.totalorder %s34, 1
      %s36 = scalar_select %p35, 0, %s34
      %s37 = sadd.s32 1, %s21
      %s38 = scalar_select %p35, %s37, %s21
      %p39 = scmp.ge.s32.totalorder %s38, 2
      %s40 = scalar_select %p39, 0, %s38
      %s41 = ssub.s32 %s21, %s40
      %s42 = ssub.s32 %s23, %s32
      %s43 = sor.u32 %s41, %s42
      %s44 = ssub.s32 %s22, %s36
      %s45 = sor.u32 %s43, %s44
      %p46 = scmp.eq.s32.totalorder %s45, 0
      %s48 = sadd.s32 %s47, 1
      %s49 = scalar_select %p46, %s47, %s48
      %p52 = pneg %p46
      %p53 = scmp.eq.s32.totalorder %s14, 1
      %p54 = por %p52, %p53
      %p55 = scmp.ne.s32.totalorder %s47, %s50
      %p56 = scmp.eq.s32.totalorder %s14, 0
      %p57 = por %p55, %p56
      %p58 = scmp.ne.s32.totalorder %s47, %s50
      %p59 = scmp.eq.s32.totalorder %s19, 1
      %p60 = por %p58, %p59
      %p61 = scmp.ne.s32.totalorder %s50, %s51
      %p62 = scmp.eq.s32.totalorder %s19, 0
      %p63 = por %p61, %p62
      %p64 = scmp.ne.s32.totalorder %s50, %s51
      %p65 = scmp.eq.s32.totalorder %s20, 1
      %p66 = por %p64, %p65
      %p68 = scmp.ne.s32.totalorder %s51, %s67
      %p69 = scmp.eq.s32.totalorder %s20, 0
      %p70 = por %p68, %p69
      %s71 = ssub.s32 %s21, %s40
      %s72 = ssub.s32 %s22, %s36
      %s73 = sor.u32 %s71, %s72
      %p74 = scmp.eq.s32.totalorder %s73, 0
      %s76 = sadd.s32 %s75, 1
      %s77 = scalar_select %p74, %s75, %s76
      %p80 = pneg %p74
      %p81 = scmp.eq.s32.totalorder %s14, 1
      %p82 = por %p80, %p81
      %p83 = scmp.ne.s32.totalorder %s75, %s78
      %p84 = scmp.eq.s32.totalorder %s14, 0
      %p85 = por %p83, %p84
      %p86 = scmp.ne.s32.totalorder %s75, %s78
      %p87 = scmp.eq.s32.totalorder %s19, 1
      %p88 = por %p86, %p87
      %p89 = scmp.ne.s32.totalorder %s78, %s79
      %p90 = scmp.eq.s32.totalorder %s19, 0
      %p91 = por %p89, %p90
      %p92 = scmp.ne.s32.totalorder %s78, %s79
      %p93 = scmp.eq.s32.totalorder %s20, 1
      %p94 = por %p92, %p93
      %p96 = scmp.ne.s32.totalorder %s79, %s95
      %p97 = scmp.eq.s32.totalorder %s20, 0
      %p98 = por %p96, %p97
      %s99 = ssub.s32 %s21, %s40
      %s100 = ssub.s32 %s22, %s36
      %s101 = sor.u32 %s99, %s100
      %p102 = scmp.eq.s32.totalorder %s101, 0
      %s104 = sadd.s32 %s103, 1
      %s105 = scalar_select %p102, %s103, %s104
      %p108 = pneg %p102
      %p109 = scmp.eq.s32.totalorder %s14, 1
      %p110 = por %p108, %p109
      %p111 = scmp.ne.s32.totalorder %s103, %s106
      %p112 = scmp.eq.s32.totalorder %s14, 0
      %p113 = por %p111, %p112
      %p114 = scmp.ne.s32.totalorder %s103, %s106
      %p115 = scmp.eq.s32.totalorder %s19, 1
      %p116 = por %p114, %p115
      %p117 = scmp.ne.s32.totalorder %s106, %s107
      %p118 = scmp.eq.s32.totalorder %s19, 0
      %p119 = por %p117, %p118
      %p120 = scmp.ne.s32.totalorder %s106, %s107
      %p121 = scmp.eq.s32.totalorder %s20, 1
      %p122 = por %p120, %p121
      %p124 = scmp.ne.s32.totalorder %s107, %s123
      %p125 = scmp.eq.s32.totalorder %s20, 0
      %p126 = por %p124, %p125
      %s127 = ssub.s32 %s21, %s40
      %s128 = ssub.s32 %s23, %s32
      %s129 = sor.u32 %s127, %s128
      %s130 = ssub.s32 %s22, %s36
      %s131 = sor.u32 %s129, %s130
      %p132 = scmp.eq.s32.totalorder %s131, 0
      %s134 = sadd.s32 %s133, 1
      %s135 = scalar_select %p132, %s133, %s134
      %p138 = pneg %p132
      %p139 = scmp.eq.s32.totalorder %s14, 1
      %p140 = por %p138, %p139
      %p141 = scmp.ne.s32.totalorder %s133, %s136
      %p142 = scmp.eq.s32.totalorder %s14, 0
      %p143 = por %p141, %p142
      %p144 = scmp.ne.s32.totalorder %s133, %s136
      %p145 = scmp.eq.s32.totalorder %s19, 1
      %p146 = por %p144, %p145
      %p147 = scmp.ne.s32.totalorder %s136, %s137
      %p148 = scmp.eq.s32.totalorder %s19, 0
      %p149 = por %p147, %p148
      %p150 = scmp.ne.s32.totalorder %s136, %s137
      %p151 = scmp.eq.s32.totalorder %s20, 1
      %p152 = por %p150, %p151
      %p154 = scmp.ne.s32.totalorder %s137, %s153
      %p155 = scmp.eq.s32.totalorder %s20, 0
      %p156 = por %p154, %p155
      %s157 = ssub.s32 %s21, %s40
      %s158 = ssub.s32 %s22, %s36
      %s159 = sor.u32 %s157, %s158
      %s160 = ssub.s32 %s23, %s32
      %s161 = sor.u32 %s159, %s160
      %p162 = scmp.eq.s32.totalorder %s161, 0
      %s164 = sadd.s32 %s163, 1
      %s165 = scalar_select %p162, %s163, %s164
      %p168 = pneg %p162
      %p169 = scmp.eq.s32.totalorder %s14, 1
      %p170 = por %p168, %p169
      %p171 = scmp.ne.s32.totalorder %s163, %s166
      %p172 = scmp.eq.s32.totalorder %s14, 0
      %p173 = por %p171, %p172
      %p174 = scmp.ne.s32.totalorder %s163, %s166
      %p175 = scmp.eq.s32.totalorder %s19, 1
      %p176 = por %p174, %p175
      %p177 = scmp.ne.s32.totalorder %s166, %s167
      %p178 = scmp.eq.s32.totalorder %s19, 0
      %p179 = por %p177, %p178
      %p180 = scmp.ne.s32.totalorder %s166, %s167
      %p181 = scmp.eq.s32.totalorder %s20, 1
      %p182 = por %p180, %p181
      %p184 = scmp.ne.s32.totalorder %s167, %s183
      %p185 = scmp.eq.s32.totalorder %s20, 0
      %p186 = por %p184, %p185
      %p187 = scmp.le.s32.totalorder 1, %s14
      %p188 = scmp.lt.s32.totalorder %s14, 3
      %p189 = pnand %p187, %p188
      %p190 = pneg %p189
      // Predicated region
      $region9: #{mha_forward.4} parent=5 // pred_check
        _
      $region10: #{mha_forward.4} parent=5 // pred_check_branch
        %192 = sbr.rel (%p189) target = $region12
      $region11: #{mha_forward.4} parent=5 // pred_region
        %s193 = ssub.s32 %s14, 1
      $region12: #{mha_forward.4} parent=5 // pred_fallthru
        _
      %p194 = scmp.lt.s32.totalorder %s14, 2
      // Predicated region
      $region13: #{mha_forward.4} parent=5 // pred_check
        %p195 = pneg %p194
      $region14: #{mha_forward.4} parent=5 // pred_check_branch
        %197 = sbr.rel (%p195) target = $region16
      $region15: #{mha_forward.4} parent=5 // pred_region
        // Predicated region
        $region17: #{mha_forward.4} parent=15 // pred_check
          %p198 = pneg %p57
        $region18: #{mha_forward.4} parent=15 // pred_check_branch
          %200 = sbr.rel (%p198) target = $region20
        $region19: #{mha_forward.4} parent=15 // pred_region
          %p201 = scmp.lt.s32.totalorder %s21, 1
          %s202 = scalar_select %p201, %s21, 1
          %p203 = scmp.lt.s32.totalorder %s23, 0
          %s204 = scalar_select %p203, %s23, 0
          %p205 = scmp.lt.s32.totalorder %s22, 0
          %s206 = scalar_select %p205, %s22, 0
          %s207 = sadd.s32 %s206, %s204
          %s208 = sadd.s32 %s207, %s202
          %s209 = smul.addr %s208, 4
          %s210 = scalar_lea.vmem %s0, %s209
        $region20: #{mha_forward.4} parent=15 // pred_fallthru
          _
        // Predicated region
        $region21: #{mha_forward.4} parent=15 // pred_check
          %p211 = pneg %p85
        $region22: #{mha_forward.4} parent=15 // pred_check_branch
          %213 = sbr.rel (%p211) target = $region24
        $region23: #{mha_forward.4} parent=15 // pred_region
          %p214 = scmp.lt.s32.totalorder %s21, 1
          %s215 = scalar_select %p214, %s21, 1
          %p216 = scmp.lt.s32.totalorder %s22, 0
          %s217 = scalar_select %p216, %s22, 0
          %s218 = sadd.s32 %s217, %s215
          %s219 = smul.addr %s218, 4
          %s220 = scalar_lea.vmem %s1, %s219
        $region24: #{mha_forward.4} parent=15 // pred_fallthru
          _
        // Predicated region
        $region25: #{mha_forward.4} parent=15 // pred_check
          %p221 = pneg %p113
        $region26: #{mha_forward.4} parent=15 // pred_check_branch
          %223 = sbr.rel (%p221) target = $region28
        $region27: #{mha_forward.4} parent=15 // pred_region
          %p224 = scmp.lt.s32.totalorder %s21, 1
          %s225 = scalar_select %p224, %s21, 1
          %p226 = scmp.lt.s32.totalorder %s22, 0
          %s227 = scalar_select %p226, %s22, 0
          %s228 = sadd.s32 %s227, %s225
          %s229 = smul.addr %s228, 4
          %s230 = scalar_lea.vmem %s2, %s229
        $region28: #{mha_forward.4} parent=15 // pred_fallthru
          _
      $region16: #{mha_forward.4} parent=5 // pred_fallthru
        _
      %p231 = scmp.le.s32.totalorder 1, %s14
      %p232 = scmp.lt.s32.totalorder %s14, 3
      %p233 = pnand %p231, %p232
      %p234 = pneg %p233
      // Predicated region
      $region29: #{mha_forward.4} parent=5 // pred_check
        _
      $region30: #{mha_forward.4} parent=5 // pred_check_branch
        %236 = sbr.rel (%p233) target = $region32
      $region31: #{mha_forward.4} parent=5 // pred_region
        %s237 = ssub.s32 %s14, 1
        %p238 = scmp.lt.s32.totalorder %s24, 1
        %s239 = scalar_select %p238, %s24, 1
        %p240 = scmp.lt.s32.totalorder %s26, 0
        %s241 = scalar_select %p240, %s26, 0
        %p242 = scmp.lt.s32.totalorder %s25, 0
        %s243 = scalar_select %p242, %s25, 0
        %s244 = sadd.s32 %s243, %s241
        %s245 = sadd.s32 %s244, %s239
        %s246 = smul.addr %s245, 4
        %s247 = scalar_lea.vmem %s0, %s246
        %p248 = pneg %p63
        %p249 = pneg %p60
        %p250 = scmp.lt.s32.totalorder %s24, 1
        %s251 = scalar_select %p250, %s24, 1
        %p252 = scmp.lt.s32.totalorder %s25, 0
        %s253 = scalar_select %p252, %s25, 0
        %s254 = sadd.s32 %s253, %s251
        %s255 = smul.addr %s254, 4
        %s256 = scalar_lea.vmem %s1, %s255
        %p257 = pneg %p91
        %p258 = pneg %p88
        %p259 = scmp.lt.s32.totalorder %s24, 1
        %s260 = scalar_select %p259, %s24, 1
        %p261 = scmp.lt.s32.totalorder %s25, 0
        %s262 = scalar_select %p261, %s25, 0
        %s263 = sadd.s32 %s262, %s260
        %s264 = smul.addr %s263, 4
        %s265 = scalar_lea.vmem %s2, %s264
        %p266 = pneg %p119
        %p267 = pneg %p116
        %p268 = pneg %p149
        %p269 = pneg %p146
        %p270 = scmp.lt.s32.totalorder %s24, 1
        %s271 = scalar_select %p270, %s24, 1
        %p272 = scmp.lt.s32.totalorder %s26, 0
        %s273 = scalar_select %p272, %s26, 0
        %p274 = scmp.lt.s32.totalorder %s25, 0
        %s275 = scalar_select %p274, %s25, 0
        %s276 = sadd.s32 %s275, %s273
        %s277 = sadd.s32 %s276, %s271
        %s278 = smul.addr %s277, 4
        %s279 = scalar_lea.vmem %s3, %s278
        %p280 = pneg %p179
        %p281 = pneg %p176
        %s282 = sand.u32 %s166, 1
        %s283 = scalar_lea.sflag [#allocation4], %s282
        %s284 = sand.u32 %s166, 1
        %s285 = smul.addr %s284, 32
        %s286 = scalar_lea.vmem [#allocation3], %s285
        %p287 = scmp.lt.s32.totalorder %s24, 1
        %s288 = scalar_select %p287, %s24, 1
        %p289 = scmp.lt.s32.totalorder %s26, 0
        %s290 = scalar_select %p289, %s26, 0
        %p291 = scmp.lt.s32.totalorder %s25, 0
        %s292 = scalar_select %p291, %s25, 0
        %s293 = sadd.s32 %s292, %s290
        %s294 = sadd.s32 %s293, %s288
        %s295 = smul.addr %s294, 4
        %s296 = scalar_lea.vmem %s0, %s295
        %p297 = scmp.lt.s32.totalorder %s24, 1
        %s298 = scalar_select %p297, %s24, 1
        %p299 = scmp.lt.s32.totalorder %s25, 0
        %s300 = scalar_select %p299, %s25, 0
        %s301 = sadd.s32 %s300, %s298
        %s302 = smul.addr %s301, 4
        %s303 = scalar_lea.vmem %s1, %s302
        %p304 = scmp.lt.s32.totalorder %s24, 1
        %s305 = scalar_select %p304, %s24, 1
        %p306 = scmp.lt.s32.totalorder %s25, 0
        %s307 = scalar_select %p306, %s25, 0
        %s308 = sadd.s32 %s307, %s305
        %s309 = smul.addr %s308, 4
        %s310 = scalar_lea.vmem %s2, %s309
        %p311 = scmp.lt.s32.totalorder %s24, 1
        %s312 = scalar_select %p311, %s24, 1
        %p313 = scmp.lt.s32.totalorder %s26, 0
        %s314 = scalar_select %p313, %s26, 0
        %p315 = scmp.lt.s32.totalorder %s25, 0
        %s316 = scalar_select %p315, %s25, 0
        %s317 = sadd.s32 %s316, %s314
        %s318 = sadd.s32 %s317, %s312
        %s319 = smul.addr %s318, 4
        %s320 = scalar_lea.vmem %s3, %s319
        %s321 = smul.u32 4, %s25
        %v323 = vld [vmem:[%s296] sm:$0xf]
        %v324 = vld [vmem:[%s303] sm:$0xf]
        %v325 = vld [vmem:[%s310] sm:$0xf]
        %vm326 = vcmask 64512
        %v328 = vsel %vm326, %v323, 0
        %v331 = vsel %vm326, %v324, 0
        %333 = vmatprep.subr.bf16.mxu0 0
        %334 = vmatpush1.bf16.xpose.msra.mxu0 0
        %335 = vmatprep.subr.bf16.mxu0 0
        %336 = vmatpush1.bf16.xpose.msra.mxu0 0
        %337 = vmatprep.subr.bf16.mxu0 0
        %338 = vmatpush1.bf16.xpose.msra.mxu0 0
        %339 = vmatprep.subr.bf16.mxu0 0
        %340 = vmatpush1.bf16.xpose.msra.mxu0 0
        %341 = vmatprep.subr.bf16.mxu0 0
        %342 = vmatpush1.bf16.xpose.msra.mxu0 0
        %343 = vmatprep.subr.bf16.mxu0 0
        %344 = vmatpush1.bf16.xpose.msra.mxu0 0
        %345 = vmatprep.subr.bf16.mxu0 0
        %346 = vmatpush1.bf16.xpose.msra.mxu0 0
        %347 = vmatprep.subr.bf16.mxu0 0
        %348 = vmatpush1.bf16.xpose.msra.mxu0 %v331
        %349 = vmatprep.subr.bf16.mxu0 0
        %350 = vmatpush2.bf16.xpose.msra.mxu0 0
        %351 = vmatprep.subr.bf16.mxu0 0
        %352 = vmatpush2.bf16.xpose.msra.mxu0 0
        %353 = vmatprep.subr.bf16.mxu0 0
        %354 = vmatpush2.bf16.xpose.msra.mxu0 0
        %355 = vmatprep.subr.bf16.mxu0 0
        %356 = vmatpush2.bf16.xpose.msra.mxu0 0
        %357 = vmatprep.subr.bf16.mxu0 0
        %358 = vmatpush2.bf16.xpose.msra.mxu0 0
        %359 = vmatprep.subr.bf16.mxu0 0
        %360 = vmatpush2.bf16.xpose.msra.mxu0 0
        %361 = vmatprep.subr.bf16.mxu0 0
        %362 = vmatpush2.bf16.xpose.msra.mxu0 0
        %363 = vmatprep.subr.bf16.mxu0 0
        %364 = vmatpush2.bf16.xpose.msra.mxu0 0
        %365 = vmatprep.mubr.bf16.mxu0 0
        %366 = vmatmul.mubr.bf16.gmra.mxu0 %v328
        %v367 = vpop.f32.mrf.mxu0
        %v368 = vadd.f32 0.0, %v367
        %v369 = vpop.f32.mrf.mxu0
        %v370 = vpop.f32.mrf.mxu0
        %v371 = vpop.f32.mrf.mxu0
        %372 = vdwg.mxu0
        %v373 = vmul.f32 %v368, 0.35355338
        %v374 = vsel %vm326, %v373, -inf
        %375 = vmax.xlane.f32.xlu0 %v374
        %v376 = vpop.xlane.xlu0 %375
        %v377 = vsub.f32 %v373, %v376
        %v378 = vmul.f32 %v377, 1.442695
        %v379 = vpow.pop %v378
        %v380 = vsel %vm326, %v379, 0.0
        %381 = vadd.xlane.f32.xlu0 %v380
        %v382 = vpop.xlane.xlu0 %381
        %v383 = vrcp.pop %v382
        %v384 = vmul.f32 %v379, %v383
        %385 = vst.msk [vmem:[%s286] sm:$0xff] %vm326, %v384
        %v386 = vpack.c.bf16 %v384, %v384
        %v388 = vsel %vm326, %v386, 0
        %vm390 = vcmask 1043456
        %v392 = vsel %vm390, %v325, 0
        %394 = vmatprep.subr.bf16.mxu0 0
        %395 = vmatpush1.bf16.msra.mxu0 0
        %396 = vmatprep.subr.bf16.mxu0 0
        %397 = vmatpush1.bf16.msra.mxu0 0
        %398 = vmatprep.subr.bf16.mxu0 0
        %399 = vmatpush1.bf16.msra.mxu0 0
        %400 = vmatprep.subr.bf16.mxu0 0
        %401 = vmatpush1.bf16.msra.mxu0 0
        %402 = vmatprep.subr.bf16.mxu0 0
        %403 = vmatpush1.bf16.msra.mxu0 0
        %404 = vmatprep.subr.bf16.mxu0 0
        %405 = vmatpush1.bf16.msra.mxu0 0
        %406 = vmatprep.subr.bf16.mxu0 0
        %407 = vmatpush1.bf16.msra.mxu0 0
        %408 = vmatprep.subr.bf16.mxu0 0
        %409 = vmatpush1.bf16.msra.mxu0 %v392
        %410 = vmatprep.subr.bf16.mxu0 0
        %411 = vmatpush2.bf16.msra.mxu0 0
        %412 = vmatprep.subr.bf16.mxu0 0
        %413 = vmatpush2.bf16.msra.mxu0 0
        %414 = vmatprep.subr.bf16.mxu0 0
        %415 = vmatpush2.bf16.msra.mxu0 0
        %416 = vmatprep.subr.bf16.mxu0 0
        %417 = vmatpush2.bf16.msra.mxu0 0
        %418 = vmatprep.subr.bf16.mxu0 0
        %419 = vmatpush2.bf16.msra.mxu0 0
        %420 = vmatprep.subr.bf16.mxu0 0
        %421 = vmatpush2.bf16.msra.mxu0 0
        %422 = vmatprep.subr.bf16.mxu0 0
        %423 = vmatpush2.bf16.msra.mxu0 0
        %424 = vmatprep.subr.bf16.mxu0 0
        %425 = vmatpush2.bf16.msra.mxu0 0
        %426 = vmatprep.mubr.bf16.mxu0 0
        %427 = vmatmul.mubr.bf16.gmra.mxu0 %v388
        %v428 = vpop.f32.mrf.mxu0
        %v429 = vadd.f32 0.0, %v428
        %v430 = vpop.f32.mrf.mxu0
        %v431 = vpop.f32.mrf.mxu0
        %v432 = vpop.f32.mrf.mxu0
        %433 = vdwg.mxu0
        %434 = vst.msk [vmem:[#allocation2] sm:$0xff] %vm326, %v429
        %v436 = vunpack.c.l.b16 %v323
        %v437 = vpack.c.b16 %v436, %v436
        %438 = vrot.lane.b32.xlu0 %v437, 120
        %v439 = vpop.permute.xlu0 %438
        %v441 = vunpack.c.l.b16 %v324
        %v442 = vpack.c.b16 %v441, %v441
        %443 = vrot.lane.b32.xlu0 %v442, 120
        %v444 = vpop.permute.xlu0 %443
        %v446 = vsel %vm326, %v439, 0
        %v449 = vsel %vm326, %v444, 0
        %451 = vmatprep.subr.bf16.mxu0 0
        %452 = vmatpush1.bf16.xpose.msra.mxu0 0
        %453 = vmatprep.subr.bf16.mxu0 0
        %454 = vmatpush1.bf16.xpose.msra.mxu0 0
        %455 = vmatprep.subr.bf16.mxu0 0
        %456 = vmatpush1.bf16.xpose.msra.mxu0 0
        %457 = vmatprep.subr.bf16.mxu0 0
        %458 = vmatpush1.bf16.xpose.msra.mxu0 0
        %459 = vmatprep.subr.bf16.mxu0 0
        %460 = vmatpush1.bf16.xpose.msra.mxu0 0
        %461 = vmatprep.subr.bf16.mxu0 0
        %462 = vmatpush1.bf16.xpose.msra.mxu0 0
        %463 = vmatprep.subr.bf16.mxu0 0
        %464 = vmatpush1.bf16.xpose.msra.mxu0 0
        %465 = vmatprep.subr.bf16.mxu0 0
        %466 = vmatpush1.bf16.xpose.msra.mxu0 %v449
        %467 = vmatprep.subr.bf16.mxu0 0
        %468 = vmatpush2.bf16.xpose.msra.mxu0 0
        %469 = vmatprep.subr.bf16.mxu0 0
        %470 = vmatpush2.bf16.xpose.msra.mxu0 0
        %471 = vmatprep.subr.bf16.mxu0 0
        %472 = vmatpush2.bf16.xpose.msra.mxu0 0
        %473 = vmatprep.subr.bf16.mxu0 0
        %474 = vmatpush2.bf16.xpose.msra.mxu0 0
        %475 = vmatprep.subr.bf16.mxu0 0
        %476 = vmatpush2.bf16.xpose.msra.mxu0 0
        %477 = vmatprep.subr.bf16.mxu0 0
        %478 = vmatpush2.bf16.xpose.msra.mxu0 0
        %479 = vmatprep.subr.bf16.mxu0 0
        %480 = vmatpush2.bf16.xpose.msra.mxu0 0
        %481 = vmatprep.subr.bf16.mxu0 0
        %482 = vmatpush2.bf16.xpose.msra.mxu0 0
        %483 = vmatprep.mubr.bf16.mxu0 0
        %484 = vmatmul.mubr.bf16.gmra.mxu0 %v446
        %v485 = vpop.f32.mrf.mxu0
        %v486 = vadd.f32 0.0, %v485
        %v487 = vpop.f32.mrf.mxu0
        %v488 = vpop.f32.mrf.mxu0
        %v489 = vpop.f32.mrf.mxu0
        %490 = vdwg.mxu0
        %v491 = vmul.f32 %v486, 0.35355338
        %v492 = vsel %vm326, %v491, -inf
        %493 = vmax.xlane.f32.xlu0 %v492
        %v494 = vpop.xlane.xlu0 %493
        %v495 = vsub.f32 %v491, %v494
        %v496 = vmul.f32 %v495, 1.442695
        %v497 = vpow.pop %v496
        %v498 = vsel %vm326, %v497, 0.0
        %499 = vadd.xlane.f32.xlu0 %v498
        %v500 = vpop.xlane.xlu0 %499
        %v501 = vrcp.pop %v500
        %v502 = vmul.f32 %v497, %v501
        %s503 = scalar_lea.vmem %s286, 8 [#allocation3]
        %504 = vst.msk [vmem:[%s503] sm:$0xff] %vm326, %v502
        %v505 = vpack.c.bf16 %v502, %v502
        %v507 = vunpack.c.l.b16 %v325
        %v508 = vpack.c.b16 %v507, %v507
        %509 = vrot.lane.b32.xlu0 %v508, 120
        %v510 = vpop.permute.xlu0 %509
        %v512 = vsel %vm326, %v505, 0
        %v515 = vsel %vm390, %v510, 0
        %517 = vmatprep.subr.bf16.mxu0 0
        %518 = vmatpush1.bf16.msra.mxu0 0
        %519 = vmatprep.subr.bf16.mxu0 0
        %520 = vmatpush1.bf16.msra.mxu0 0
        %521 = vmatprep.subr.bf16.mxu0 0
        %522 = vmatpush1.bf16.msra.mxu0 0
        %523 = vmatprep.subr.bf16.mxu0 0
        %524 = vmatpush1.bf16.msra.mxu0 0
        %525 = vmatprep.subr.bf16.mxu0 0
        %526 = vmatpush1.bf16.msra.mxu0 0
        %527 = vmatprep.subr.bf16.mxu0 0
        %528 = vmatpush1.bf16.msra.mxu0 0
        %529 = vmatprep.subr.bf16.mxu0 0
        %530 = vmatpush1.bf16.msra.mxu0 0
        %531 = vmatprep.subr.bf16.mxu0 0
        %532 = vmatpush1.bf16.msra.mxu0 %v515
        %533 = vmatprep.subr.bf16.mxu0 0
        %534 = vmatpush2.bf16.msra.mxu0 0
        %535 = vmatprep.subr.bf16.mxu0 0
        %536 = vmatpush2.bf16.msra.mxu0 0
        %537 = vmatprep.subr.bf16.mxu0 0
        %538 = vmatpush2.bf16.msra.mxu0 0
        %539 = vmatprep.subr.bf16.mxu0 0
        %540 = vmatpush2.bf16.msra.mxu0 0
        %541 = vmatprep.subr.bf16.mxu0 0
        %542 = vmatpush2.bf16.msra.mxu0 0
        %543 = vmatprep.subr.bf16.mxu0 0
        %544 = vmatpush2.bf16.msra.mxu0 0
        %545 = vmatprep.subr.bf16.mxu0 0
        %546 = vmatpush2.bf16.msra.mxu0 0
        %547 = vmatprep.subr.bf16.mxu0 0
        %548 = vmatpush2.bf16.msra.mxu0 0
        %549 = vmatprep.mubr.bf16.mxu0 0
        %550 = vmatmul.mubr.bf16.gmra.mxu0 %v512
        %v551 = vpop.f32.mrf.mxu0
        %v552 = vadd.f32 0.0, %v551
        %v553 = vpop.f32.mrf.mxu0
        %v554 = vpop.f32.mrf.mxu0
        %v555 = vpop.f32.mrf.mxu0
        %556 = vdwg.mxu0
        %558 = vrot.lane.b32.xlu0 %v552, 8
        %v559 = vpop.permute.xlu0 %558
        %vm561 = vcmask 130112
        %562 = vst.msk [vmem:[#allocation2] sm:$0xff] %vm561, %v559
        %563 = vrot.lane.b32.xlu0 %v437, 112
        %v564 = vpop.permute.xlu0 %563
        %565 = vrot.lane.b32.xlu0 %v442, 112
        %v566 = vpop.permute.xlu0 %565
        %v568 = vsel %vm326, %v564, 0
        %v571 = vsel %vm326, %v566, 0
        %573 = vmatprep.subr.bf16.mxu0 0
        %574 = vmatpush1.bf16.xpose.msra.mxu0 0
        %575 = vmatprep.subr.bf16.mxu0 0
        %576 = vmatpush1.bf16.xpose.msra.mxu0 0
        %577 = vmatprep.subr.bf16.mxu0 0
        %578 = vmatpush1.bf16.xpose.msra.mxu0 0
        %579 = vmatprep.subr.bf16.mxu0 0
        %580 = vmatpush1.bf16.xpose.msra.mxu0 0
        %581 = vmatprep.subr.bf16.mxu0 0
        %582 = vmatpush1.bf16.xpose.msra.mxu0 0
        %583 = vmatprep.subr.bf16.mxu0 0
        %584 = vmatpush1.bf16.xpose.msra.mxu0 0
        %585 = vmatprep.subr.bf16.mxu0 0
        %586 = vmatpush1.bf16.xpose.msra.mxu0 0
        %587 = vmatprep.subr.bf16.mxu0 0
        %588 = vmatpush1.bf16.xpose.msra.mxu0 %v571
        %589 = vmatprep.subr.bf16.mxu0 0
        %590 = vmatpush2.bf16.xpose.msra.mxu0 0
        %591 = vmatprep.subr.bf16.mxu0 0
        %592 = vmatpush2.bf16.xpose.msra.mxu0 0
        %593 = vmatprep.subr.bf16.mxu0 0
        %594 = vmatpush2.bf16.xpose.msra.mxu0 0
        %595 = vmatprep.subr.bf16.mxu0 0
        %596 = vmatpush2.bf16.xpose.msra.mxu0 0
        %597 = vmatprep.subr.bf16.mxu0 0
        %598 = vmatpush2.bf16.xpose.msra.mxu0 0
        %599 = vmatprep.subr.bf16.mxu0 0
        %600 = vmatpush2.bf16.xpose.msra.mxu0 0
        %601 = vmatprep.subr.bf16.mxu0 0
        %602 = vmatpush2.bf16.xpose.msra.mxu0 0
        %603 = vmatprep.subr.bf16.mxu0 0
        %604 = vmatpush2.bf16.xpose.msra.mxu0 0
        %605 = vmatprep.mubr.bf16.mxu0 0
        %606 = vmatmul.mubr.bf16.gmra.mxu0 %v568
        %v607 = vpop.f32.mrf.mxu0
        %v608 = vadd.f32 0.0, %v607
        %v609 = vpop.f32.mrf.mxu0
        %v610 = vpop.f32.mrf.mxu0
        %v611 = vpop.f32.mrf.mxu0
        %612 = vdwg.mxu0
        %v613 = vmul.f32 %v608, 0.35355338
        %v614 = vsel %vm326, %v613, -inf
        %615 = vmax.xlane.f32.xlu0 %v614
        %v616 = vpop.xlane.xlu0 %615
        %v617 = vsub.f32 %v613, %v616
        %v618 = vmul.f32 %v617, 1.442695
        %v619 = vpow.pop %v618
        %v620 = vsel %vm326, %v619, 0.0
        %621 = vadd.xlane.f32.xlu0 %v620
        %v622 = vpop.xlane.xlu0 %621
        %v623 = vrcp.pop %v622
        %v624 = vmul.f32 %v619, %v623
        %s625 = scalar_lea.vmem %s286, 16 [#allocation3]
        %626 = vst.msk [vmem:[%s625] sm:$0xff] %vm326, %v624
        %v627 = vpack.c.bf16 %v624, %v624
        %628 = vrot.lane.b32.xlu0 %v508, 112
        %v629 = vpop.permute.xlu0 %628
        %v631 = vsel %vm326, %v627, 0
        %v634 = vsel %vm390, %v629, 0
        %636 = vmatprep.subr.bf16.mxu0 0
        %637 = vmatpush1.bf16.msra.mxu0 0
        %638 = vmatprep.subr.bf16.mxu0 0
        %639 = vmatpush1.bf16.msra.mxu0 0
        %640 = vmatprep.subr.bf16.mxu0 0
        %641 = vmatpush1.bf16.msra.mxu0 0
        %642 = vmatprep.subr.bf16.mxu0 0
        %643 = vmatpush1.bf16.msra.mxu0 0
        %644 = vmatprep.subr.bf16.mxu0 0
        %645 = vmatpush1.bf16.msra.mxu0 0
        %646 = vmatprep.subr.bf16.mxu0 0
        %647 = vmatpush1.bf16.msra.mxu0 0
        %648 = vmatprep.subr.bf16.mxu0 0
        %649 = vmatpush1.bf16.msra.mxu0 0
        %650 = vmatprep.subr.bf16.mxu0 0
        %651 = vmatpush1.bf16.msra.mxu0 %v634
        %652 = vmatprep.subr.bf16.mxu0 0
        %653 = vmatpush2.bf16.msra.mxu0 0
        %654 = vmatprep.subr.bf16.mxu0 0
        %655 = vmatpush2.bf16.msra.mxu0 0
        %656 = vmatprep.subr.bf16.mxu0 0
        %657 = vmatpush2.bf16.msra.mxu0 0
        %658 = vmatprep.subr.bf16.mxu0 0
        %659 = vmatpush2.bf16.msra.mxu0 0
        %660 = vmatprep.subr.bf16.mxu0 0
        %661 = vmatpush2.bf16.msra.mxu0 0
        %662 = vmatprep.subr.bf16.mxu0 0
        %663 = vmatpush2.bf16.msra.mxu0 0
        %664 = vmatprep.subr.bf16.mxu0 0
        %665 = vmatpush2.bf16.msra.mxu0 0
        %666 = vmatprep.subr.bf16.mxu0 0
        %667 = vmatpush2.bf16.msra.mxu0 0
        %668 = vmatprep.mubr.bf16.mxu0 0
        %669 = vmatmul.mubr.bf16.gmra.mxu0 %v631
        %v670 = vpop.f32.mrf.mxu0
        %v671 = vadd.f32 0.0, %v670
        %v672 = vpop.f32.mrf.mxu0
        %v673 = vpop.f32.mrf.mxu0
        %v674 = vpop.f32.mrf.mxu0
        %675 = vdwg.mxu0
        %677 = vrot.lane.b32.xlu0 %v671, 16
        %v678 = vpop.permute.xlu0 %677
        %vm680 = vcmask 195712
        %681 = vst.msk [vmem:[#allocation2] sm:$0xff] %vm680, %v678
        %682 = vrot.lane.b32.xlu0 %v437, 104
        %v683 = vpop.permute.xlu0 %682
        %684 = vrot.lane.b32.xlu0 %v442, 104
        %v685 = vpop.permute.xlu0 %684
        %v687 = vsel %vm326, %v683, 0
        %v690 = vsel %vm326, %v685, 0
        %692 = vmatprep.subr.bf16.mxu0 0
        %693 = vmatpush1.bf16.xpose.msra.mxu0 0
        %694 = vmatprep.subr.bf16.mxu0 0
        %695 = vmatpush1.bf16.xpose.msra.mxu0 0
        %696 = vmatprep.subr.bf16.mxu0 0
        %697 = vmatpush1.bf16.xpose.msra.mxu0 0
        %698 = vmatprep.subr.bf16.mxu0 0
        %699 = vmatpush1.bf16.xpose.msra.mxu0 0
        %700 = vmatprep.subr.bf16.mxu0 0
        %701 = vmatpush1.bf16.xpose.msra.mxu0 0
        %702 = vmatprep.subr.bf16.mxu0 0
        %703 = vmatpush1.bf16.xpose.msra.mxu0 0
        %704 = vmatprep.subr.bf16.mxu0 0
        %705 = vmatpush1.bf16.xpose.msra.mxu0 0
        %706 = vmatprep.subr.bf16.mxu0 0
        %707 = vmatpush1.bf16.xpose.msra.mxu0 %v690
        %708 = vmatprep.subr.bf16.mxu0 0
        %709 = vmatpush2.bf16.xpose.msra.mxu0 0
        %710 = vmatprep.subr.bf16.mxu0 0
        %711 = vmatpush2.bf16.xpose.msra.mxu0 0
        %712 = vmatprep.subr.bf16.mxu0 0
        %713 = vmatpush2.bf16.xpose.msra.mxu0 0
        %714 = vmatprep.subr.bf16.mxu0 0
        %715 = vmatpush2.bf16.xpose.msra.mxu0 0
        %716 = vmatprep.subr.bf16.mxu0 0
        %717 = vmatpush2.bf16.xpose.msra.mxu0 0
        %718 = vmatprep.subr.bf16.mxu0 0
        %719 = vmatpush2.bf16.xpose.msra.mxu0 0
        %720 = vmatprep.subr.bf16.mxu0 0
        %721 = vmatpush2.bf16.xpose.msra.mxu0 0
        %722 = vmatprep.subr.bf16.mxu0 0
        %723 = vmatpush2.bf16.xpose.msra.mxu0 0
        %724 = vmatprep.mubr.bf16.mxu0 0
        %725 = vmatmul.mubr.bf16.gmra.mxu0 %v687
        %v726 = vpop.f32.mrf.mxu0
        %v727 = vadd.f32 0.0, %v726
        %v728 = vpop.f32.mrf.mxu0
        %v729 = vpop.f32.mrf.mxu0
        %v730 = vpop.f32.mrf.mxu0
        %731 = vdwg.mxu0
        %v732 = vmul.f32 %v727, 0.35355338
        %v733 = vsel %vm326, %v732, -inf
        %734 = vmax.xlane.f32.xlu0 %v733
        %v735 = vpop.xlane.xlu0 %734
        %v736 = vsub.f32 %v732, %v735
        %v737 = vmul.f32 %v736, 1.442695
        %v738 = vpow.pop %v737
        %v739 = vsel %vm326, %v738, 0.0
        %740 = vadd.xlane.f32.xlu0 %v739
        %v741 = vpop.xlane.xlu0 %740
        %v742 = vrcp.pop %v741
        %v743 = vmul.f32 %v738, %v742
        %s744 = scalar_lea.vmem %s286, 24 [#allocation3]
        %745 = vst.msk [vmem:[%s744] sm:$0xff] %vm326, %v743
        %v746 = vpack.c.bf16 %v743, %v743
        %747 = vrot.lane.b32.xlu0 %v508, 104
        %v748 = vpop.permute.xlu0 %747
        %v750 = vsel %vm326, %v746, 0
        %v753 = vsel %vm390, %v748, 0
        %755 = vmatprep.subr.bf16.mxu0 0
        %756 = vmatpush1.bf16.msra.mxu0 0
        %757 = vmatprep.subr.bf16.mxu0 0
        %758 = vmatpush1.bf16.msra.mxu0 0
        %759 = vmatprep.subr.bf16.mxu0 0
        %760 = vmatpush1.bf16.msra.mxu0 0
        %761 = vmatprep.subr.bf16.mxu0 0
        %762 = vmatpush1.bf16.msra.mxu0 0
        %763 = vmatprep.subr.bf16.mxu0 0
        %764 = vmatpush1.bf16.msra.mxu0 0
        %765 = vmatprep.subr.bf16.mxu0 0
        %766 = vmatpush1.bf16.msra.mxu0 0
        %767 = vmatprep.subr.bf16.mxu0 0
        %768 = vmatpush1.bf16.msra.mxu0 0
        %769 = vmatprep.subr.bf16.mxu0 0
        %770 = vmatpush1.bf16.msra.mxu0 %v753
        %771 = vmatprep.subr.bf16.mxu0 0
        %772 = vmatpush2.bf16.msra.mxu0 0
        %773 = vmatprep.subr.bf16.mxu0 0
        %774 = vmatpush2.bf16.msra.mxu0 0
        %775 = vmatprep.subr.bf16.mxu0 0
        %776 = vmatpush2.bf16.msra.mxu0 0
        %777 = vmatprep.subr.bf16.mxu0 0
        %778 = vmatpush2.bf16.msra.mxu0 0
        %779 = vmatprep.subr.bf16.mxu0 0
        %780 = vmatpush2.bf16.msra.mxu0 0
        %781 = vmatprep.subr.bf16.mxu0 0
        %782 = vmatpush2.bf16.msra.mxu0 0
        %783 = vmatprep.subr.bf16.mxu0 0
        %784 = vmatpush2.bf16.msra.mxu0 0
        %785 = vmatprep.subr.bf16.mxu0 0
        %786 = vmatpush2.bf16.msra.mxu0 0
        %787 = vmatprep.mubr.bf16.mxu0 0
        %788 = vmatmul.mubr.bf16.gmra.mxu0 %v750
        %v789 = vpop.f32.mrf.mxu0
        %v790 = vadd.f32 0.0, %v789
        %v791 = vpop.f32.mrf.mxu0
        %v792 = vpop.f32.mrf.mxu0
        %v793 = vpop.f32.mrf.mxu0
        %794 = vdwg.mxu0
        %796 = vrot.lane.b32.xlu0 %v790, 24
        %v797 = vpop.permute.xlu0 %796
        %vm799 = vcmask 261312
        %800 = vst.msk [vmem:[#allocation2] sm:$0xff] %vm799, %v797
        %v801 = vld [vmem:[#allocation2] sm:$0xff]
        %v802 = vpack.c.bf16 %v801, %v801
        %vm803 = vcmask 257024
        %804 = vst.msk [vmem:[%s320] sm:$0xf] %vm803, %v802
        %p805 = scmp.lt.s32.totalorder %s24, 1
        %s806 = scalar_select %p805, %s24, 1
        %p807 = scmp.lt.s32.totalorder %s26, 0
        %s808 = scalar_select %p807, %s26, 0
        %p809 = scmp.lt.s32.totalorder %s25, 0
        %s810 = scalar_select %p809, %s25, 0
        %s811 = sadd.s32 %s810, %s808
        %s812 = sadd.s32 %s811, %s806
        %s813 = smul.addr %s812, 4
        %s814 = scalar_lea.vmem %s3, %s813
        %s815 = sand.u32 %s166, 1
        %s816 = scalar_lea.sflag [#allocation4], %s815
        %s817 = sand.u32 %s166, 1
        %s818 = smul.addr %s817, 32
        %s819 = scalar_lea.vmem [#allocation3], %s818
        // Predicated region
        $region33: #{mha_forward.4} parent=31 // pred_check
          %p820 = pneg %p146
        $region34: #{mha_forward.4} parent=31 // pred_check_branch
          %822 = sbr.rel (%p820) target = $region36
        $region35: #{mha_forward.4} parent=31 // pred_region
          _
        $region36: #{mha_forward.4} parent=31 // pred_fallthru
          _
        // Predicated region
        $region37: #{mha_forward.4} parent=31 // pred_check
          %p823 = pneg %p176
        $region38: #{mha_forward.4} parent=31 // pred_check_branch
          %825 = sbr.rel (%p823) target = $region40
        $region39: #{mha_forward.4} parent=31 // pred_region
          %s826 = smul.u32 4, %s25
          %s828 = ssub.s32 512, 512
          %829 = vsyncadd %s816, %s828
          %s830 = sadd.s32 %s26, %s826
          %s831 = smul.addr %s24, 4
          %s832 = sadd.s32 %s830, %s831
          %s833 = smul.addr %s832, 128
          %s834 = scalar_lea.hbm %s4, %s833
          %s835 = sshll.u32 %s819, 4
          %s836 = int_to_ptr.vmem [resolvable:$true] %s835
          %841 = dma.vmem_to_hbm [thread:$0]  %s836, 512, %s834, %s816, 128, 128, 8
        $region40: #{mha_forward.4} parent=31 // pred_fallthru
          _
      $region32: #{mha_forward.4} parent=5 // pred_fallthru
        _
      %p842 = scmp.le.s32.totalorder 2, %s14
      // Predicated region
      $region41: #{mha_forward.4} parent=5 // pred_check
        %p843 = pneg %p842
      $region42: #{mha_forward.4} parent=5 // pred_check_branch
        %845 = sbr.rel (%p843) target = $region44
      $region43: #{mha_forward.4} parent=5 // pred_region
        %s846 = ssub.s32 %s14, 2
        // Predicated region
        $region45: #{mha_forward.4} parent=43 // pred_check
          %p847 = pneg %p152
        $region46: #{mha_forward.4} parent=43 // pred_check_branch
          %849 = sbr.rel (%p847) target = $region48
        $region47: #{mha_forward.4} parent=43 // pred_region
          %p850 = scmp.lt.s32.totalorder %s27, 1
          %s851 = scalar_select %p850, %s27, 1
          %p852 = scmp.lt.s32.totalorder %s29, 0
          %s853 = scalar_select %p852, %s29, 0
          %p854 = scmp.lt.s32.totalorder %s28, 0
          %s855 = scalar_select %p854, %s28, 0
          %s856 = sadd.s32 %s855, %s853
          %s857 = sadd.s32 %s856, %s851
          %s858 = smul.addr %s857, 4
          %s859 = scalar_lea.vmem %s3, %s858
        $region48: #{mha_forward.4} parent=43 // pred_fallthru
          _
        // Predicated region
        $region49: #{mha_forward.4} parent=43 // pred_check
          %p860 = pneg %p182
        $region50: #{mha_forward.4} parent=43 // pred_check_branch
          %862 = sbr.rel (%p860) target = $region52
        $region51: #{mha_forward.4} parent=43 // pred_region
          %s863 = sand.u32 %s167, 1
          %s864 = scalar_lea.sflag [#allocation4], %s863
          %s865 = sand.u32 %s167, 1
          %s866 = smul.addr %s865, 32
          %s867 = scalar_lea.vmem [#allocation3], %s866
          %868 = dma.done %s864, 512
        $region52: #{mha_forward.4} parent=43 // pred_fallthru
          _
      $region44: #{mha_forward.4} parent=5 // pred_fallthru
        _
    $region6: #{mha_forward.4} parent=1 // loop_footer
      %s18 = sadd.s32 1, %s14
    $region7: #{mha_forward.4} parent=1 // loop_footer_branch
      %13 = sbr.rel target = $region3
    $region8: #{mha_forward.4} parent=1 // loop_exit
      _
    %869 = vsyncpa [#allocation4], 1
    %s870 = scalar_lea.sflag [#allocation4], 1
    %871 = vsyncpa %s870, 1

</llo_original>
